<compile_context>
chip_gen: v7x
topology: tpu7x:2x2x1
jax: 0.10.0
libtpu: 0.0.40
codegen_flags: <defaults>
</compile_context>

<pallas_src>
import functools
import numpy as np
import jax
import jax.numpy as jnp
from jax import lax
from jax.experimental import pallas as pl
from jax.experimental.pallas import tpu as pltpu

# ---------------- deterministic Canny parameters ----------------
_FILTER_SIZE = 5
# scipy.signal.gaussian(5, std=1.0), unnormalized window
_GAUSS = np.exp(-0.5 * ((np.arange(_FILTER_SIZE) - (_FILTER_SIZE - 1) / 2.0) ** 2))
GAUSS = [float(v) for v in _GAUSS]

# Sobel is separable: SOBEL_H = [1,2,1]^T (rows) x [1,0,-1] (cols); SOBEL_V = transpose.

# 8 directional 3x3 filters: (center +1, one neighbor -1); neighbor offsets (drow, dcol)
# in the order filter_0, filter_45, ..., filter_315 of the reference module.
DIR_OFFS = ((0, 1), (1, 1), (1, 0), (1, -1), (0, -1), (-1, -1), (-1, 0), (-1, 1))

# Orientation binning: the reference computes
#     k = round((atan2(gy, gx) * (180/3.14159) + 180) / 45);  idx_pos = k % 8
# i.e. it partitions the (gx, gy) plane into eight 45-degree wedges whose boundary
# rays sit at angles (j - 3.5) * 3.14159 / 4, j = 0..7.  We bin with cross-product
# sign tests against those rays (identical except exactly on a wedge boundary).
_PI_REF = 3.14159
_BOUND = [(j - 3.5) * _PI_REF / 4.0 for j in range(8)]
COSB = [float(np.cos(b)) for b in _BOUND]
SINB = [float(np.sin(b)) for b in _BOUND]


def _canny_kernel(img_ref, out_ref, *, H, W):
    x = img_ref[...]                       # (TB, Hp, Wp) float32, zero padded
    TB, Hp, Wp = x.shape

    row_ids = lax.broadcasted_iota(jnp.int32, (TB, Hp, Wp), 1)
    col_ids = lax.broadcasted_iota(jnp.int32, (TB, Hp, Wp), 2)

    def _row_mask(d):
        m = row_ids < (H - d)
        if d < 0:
            m = m & (row_ids >= -d)
        return m

    def _col_mask(d):
        m = col_ids < (W - d)
        if d < 0:
            m = m & (col_ids >= -d)
        return m

    row_masks = {d: _row_mask(d) for d in (-2, -1, 1, 2)}
    col_masks = {d: _col_mask(d) for d in (-2, -1, 1, 2)}
    valid = (row_ids < H) & (col_ids < W)

    def shiftv(a, dr, dc):
        """result[r,c] = a[r+dr, c+dc] if the tap is inside the HxW image, else 0."""
        y = a
        m = None
        if dr:
            y = pltpu.roll(y, shift=(-dr) % Hp, axis=1)
            m = row_masks[dr]
        if dc:
            y = pltpu.roll(y, shift=(-dc) % Wp, axis=2)
            cm = col_masks[dc]
            m = cm if m is None else (m & cm)
        if m is not None:
            y = jnp.where(m, y, 0.0)
        return y

    # --- separable gaussian blur: 1x5 then 5x1 conv, zero pad 2, bias 0 ---
    blur_h = GAUSS[2] * x
    for k in (0, 1, 3, 4):
        blur_h = blur_h + GAUSS[k] * shiftv(x, 0, k - 2)
    blurred = GAUSS[2] * blur_h
    for k in (0, 1, 3, 4):
        blurred = blurred + GAUSS[k] * shiftv(blur_h, k - 2, 0)

    # --- sobel 3x3 (cross-correlation, zero pad 1), separable form ---
    dx = shiftv(blurred, 0, -1) - shiftv(blurred, 0, 1)    # [1,0,-1] along cols
    gx = 2.0 * dx + shiftv(dx, -1, 0) + shiftv(dx, 1, 0)   # [1,2,1]  along rows
    dy = shiftv(blurred, -1, 0) - shiftv(blurred, 1, 0)    # [1,0,-1] along rows
    gy = 2.0 * dy + shiftv(dy, 0, -1) + shiftv(dy, 0, 1)   # [1,2,1]  along cols

    # --- gradient magnitude + per-image max (over the valid HxW region) ---
    gm = jnp.sqrt(gx * gx + gy * gy)
    gm_valid = jnp.where(valid, gm, 0.0)
    gmax = jnp.max(gm_valid, axis=1, keepdims=True)
    gmax = jnp.max(gmax, axis=2, keepdims=True)            # (TB, 1, 1)
    scale = 255.0 * pl.reciprocal(gmax)                    # exact reciprocal (EUP)

    # --- orientation -> direction bin in 0..7 (wedge sign tests; see note above) ---
    prev = COSB[0] * gy - SINB[0] * gx
    k_idx = jnp.zeros(x.shape, jnp.int32)
    for j in range(1, 8):
        cur = COSB[j] * gy - SINB[j] * gx
        k_idx = jnp.where((prev >= 0.0) & (cur < 0.0), jnp.int32(j), k_idx)
        prev = cur
    # torch.atan2(0, 0) == 0 -> orientation 180 deg -> bin 4
    k_idx = jnp.where((gx == 0.0) & (gy == 0.0), jnp.int32(4), k_idx)
    idx_pos = k_idx
    idx_neg = jnp.where(k_idx >= 4, k_idx - 4, k_idx + 4)

    # --- directional difference bank + per-pixel channel gather + NMS ---
    # NMS is invariant to the positive per-image scaling, so the differences are
    # formed on unnormalized gm and the *255/max scale is applied once at the end.
    row_sh = {0: gm, -1: shiftv(gm, -1, 0), 1: shiftv(gm, 1, 0)}
    pos_sel = jnp.zeros_like(gm)
    neg_sel = jnp.zeros_like(gm)
    for ci, (dr, dc) in enumerate(DIR_OFFS):
        nb = row_sh[dr]
        if dc:
            nb = pltpu.roll(nb, shift=(-dc) % Wp, axis=2)
            nb = jnp.where(col_masks[dc], nb, 0.0)
        filt_c = gm - nb
        pos_sel = jnp.where(idx_pos == ci, filt_c, pos_sel)
        neg_sel = jnp.where(idx_neg == ci, filt_c, neg_sel)

    is_max = jnp.minimum(pos_sel, neg_sel) > 0.0
    out_ref[...] = jnp.where(is_max, gm * scale, 0.0)


def _round_up(v, m):
    return ((v + m - 1) // m) * m


def _choose_tb(n, hp, wp):
    # ~32 live f32/i32 (TB, Hp, Wp) values in the kernel; keep the working set
    # comfortably inside scoped VMEM on every chip generation.
    budget = 16 * 1024 * 1024
    per_image = hp * wp * 4 * 32
    tb = max(1, min(n, budget // max(per_image, 1)))
    while n % tb:                 # keep the grid exact (no batch padding)
        tb -= 1
    return tb


def _canny_batch(x):
    """x: (N, H, W) float32 -> thin-edge maps (N, H, W) float32."""
    N, H, W = x.shape
    Hp = _round_up(max(H, 8), 8)
    Wp = _round_up(max(W, 128), 128)     # lane-dense output
    TB = _choose_tb(N, Hp, Wp)

    xp = jnp.pad(x, ((0, 0), (0, Hp - H), (0, Wp - W)))
    kern = functools.partial(_canny_kernel, H=H, W=W)
    out = pl.pallas_call(
        kern,
        out_shape=jax.ShapeDtypeStruct((N, Hp, Wp), jnp.float32),
        grid_spec=pltpu.PrefetchScalarGridSpec(
            num_scalar_prefetch=0,
            grid=(N // TB,),
            in_specs=[pl.BlockSpec((TB, Hp, Wp), lambda b: (b, 0, 0))],
            out_specs=pl.BlockSpec((TB, Hp, Wp), lambda b: (b, 0, 0)),
        ),
        compiler_params=pltpu.CompilerParams(
            dimension_semantics=("parallel",),
            vmem_limit_bytes=48 * 1024 * 1024,
        ),
    )(xp)
    return out[:, :H, :W]


def canny_forward(img):
    """img: (B, C, H, W) -> per-channel thin-edge maps, same shape."""
    B, C, H, W = img.shape
    x = img.reshape(B * C, H, W).astype(jnp.float32)
    edges = _canny_batch(x)
    return edges.reshape(B, C, H, W)


def gradient_difference_loss_canny(pred, target):
    """Forward of GradientDifferenceLossCanny_v1: MSE between edge maps."""
    # TODO(synk): cv2.Canny's double-threshold + hysteresis connectivity is
    # data-dependent graph traversal with no clean data-parallel Pallas
    # equivalent; edges stop at gradient-magnitude NMS (thresholds unused).
    pred_edges = canny_forward(pred)
    target_edges = canny_forward(target)
    return jnp.mean((pred_edges - target_edges) ** 2)


if __name__ == "__main__":
    key = jax.random.PRNGKey(0)
    k1, k2 = jax.random.split(key)
    pred = jax.random.uniform(k1, (2, 1, 16, 16), dtype=jnp.float32) * 255.0
    target = jax.random.uniform(k2, (2, 1, 16, 16), dtype=jnp.float32) * 255.0
    loss = gradient_difference_loss_canny(pred, target)
    jax.block_until_ready(loss)
    print("KERNEL_OK")
</pallas_src>

<mosaic_0001>
module attributes {stable_mosaic.version = 11 : i64} {
  func.func @_canny_kernel(%arg0: i32, %arg1: memref<2x16x128xf32, #tpu.memory_space<vmem>>, %arg2: memref<2x16x128xf32, #tpu.memory_space<vmem>>) attributes {dimension_semantics = [#tpu.dimension_semantics<parallel>], iteration_bounds = array<i64: 1>, scalar_prefetch = 0 : i64, scratch_operands = 0 : i64, tpu.core_type = #tpu.core_type<tc>, window_params = [{transform_indices = @transform_0, window_bounds = array<i64: 2, 16, 128>}, {transform_indices = @transform_1, window_bounds = array<i64: 2, 16, 128>}]} {
    %c0 = arith.constant 0 : index
    %c0_0 = arith.constant 0 : index
    %c0_1 = arith.constant 0 : index
    %0 = vector.load %arg1[%c0, %c0_0, %c0_1] : memref<2x16x128xf32, #tpu.memory_space<vmem>>, vector<2x16x128xf32>
    %1 = tpu.iota {dimensions = array<i32: 1>} : vector<2x16x128xi32>
    %2 = tpu.iota {dimensions = array<i32: 2>} : vector<2x16x128xi32>
    %c18_i32 = arith.constant 18 : i32
    %3 = vector.broadcast %c18_i32 : i32 to vector<2x16x128xi32>
    %4 = arith.cmpi slt, %1, %3 : vector<2x16x128xi32>
    %c2_i32 = arith.constant 2 : i32
    %5 = vector.broadcast %c2_i32 : i32 to vector<2x16x128xi32>
    %6 = arith.cmpi sge, %1, %5 : vector<2x16x128xi32>
    %7 = arith.andi %4, %6 : vector<2x16x128xi1>
    %c17_i32 = arith.constant 17 : i32
    %8 = vector.broadcast %c17_i32 : i32 to vector<2x16x128xi32>
    %9 = arith.cmpi slt, %1, %8 : vector<2x16x128xi32>
    %c1_i32 = arith.constant 1 : i32
    %10 = vector.broadcast %c1_i32 : i32 to vector<2x16x128xi32>
    %11 = arith.cmpi sge, %1, %10 : vector<2x16x128xi32>
    %12 = arith.andi %9, %11 : vector<2x16x128xi1>
    %c15_i32 = arith.constant 15 : i32
    %13 = vector.broadcast %c15_i32 : i32 to vector<2x16x128xi32>
    %14 = arith.cmpi slt, %1, %13 : vector<2x16x128xi32>
    %c14_i32 = arith.constant 14 : i32
    %15 = vector.broadcast %c14_i32 : i32 to vector<2x16x128xi32>
    %16 = arith.cmpi slt, %1, %15 : vector<2x16x128xi32>
    %c18_i32_2 = arith.constant 18 : i32
    %17 = vector.broadcast %c18_i32_2 : i32 to vector<2x16x128xi32>
    %18 = arith.cmpi slt, %2, %17 : vector<2x16x128xi32>
    %c2_i32_3 = arith.constant 2 : i32
    %19 = vector.broadcast %c2_i32_3 : i32 to vector<2x16x128xi32>
    %20 = arith.cmpi sge, %2, %19 : vector<2x16x128xi32>
    %21 = arith.andi %18, %20 : vector<2x16x128xi1>
    %c17_i32_4 = arith.constant 17 : i32
    %22 = vector.broadcast %c17_i32_4 : i32 to vector<2x16x128xi32>
    %23 = arith.cmpi slt, %2, %22 : vector<2x16x128xi32>
    %c1_i32_5 = arith.constant 1 : i32
    %24 = vector.broadcast %c1_i32_5 : i32 to vector<2x16x128xi32>
    %25 = arith.cmpi sge, %2, %24 : vector<2x16x128xi32>
    %26 = arith.andi %23, %25 : vector<2x16x128xi1>
    %c15_i32_6 = arith.constant 15 : i32
    %27 = vector.broadcast %c15_i32_6 : i32 to vector<2x16x128xi32>
    %28 = arith.cmpi slt, %2, %27 : vector<2x16x128xi32>
    %c14_i32_7 = arith.constant 14 : i32
    %29 = vector.broadcast %c14_i32_7 : i32 to vector<2x16x128xi32>
    %30 = arith.cmpi slt, %2, %29 : vector<2x16x128xi32>
    %c16_i32 = arith.constant 16 : i32
    %31 = vector.broadcast %c16_i32 : i32 to vector<2x16x128xi32>
    %32 = arith.cmpi slt, %1, %31 : vector<2x16x128xi32>
    %c16_i32_8 = arith.constant 16 : i32
    %33 = vector.broadcast %c16_i32_8 : i32 to vector<2x16x128xi32>
    %34 = arith.cmpi slt, %2, %33 : vector<2x16x128xi32>
    %35 = arith.andi %32, %34 : vector<2x16x128xi1>
    %cst = arith.constant 1.000000e+00 : f32
    %36 = vector.broadcast %cst : f32 to vector<2x16x128xf32>
    %37 = arith.mulf %36, %0 : vector<2x16x128xf32>
    %c2_i32_9 = arith.constant 2 : i32
    %38 = tpu.dynamic_rotate %0 by %c2_i32_9 dim 2 : vector<2x16x128xf32>, i32 -> vector<2x16x128xf32>
    %cst_10 = arith.constant 0.000000e+00 : f32
    %39 = vector.broadcast %cst_10 : f32 to vector<2x16x128xf32>
    %40 = arith.select %21, %38, %39 : vector<2x16x128xi1>, vector<2x16x128xf32>
    %cst_11 = arith.constant 0.135335281 : f32
    %41 = vector.broadcast %cst_11 : f32 to vector<2x16x128xf32>
    %42 = arith.mulf %41, %40 : vector<2x16x128xf32>
    %43 = arith.addf %37, %42 : vector<2x16x128xf32>
    %c1_i32_12 = arith.constant 1 : i32
    %44 = tpu.dynamic_rotate %0 by %c1_i32_12 dim 2 : vector<2x16x128xf32>, i32 -> vector<2x16x128xf32>
    %cst_13 = arith.constant 0.000000e+00 : f32
    %45 = vector.broadcast %cst_13 : f32 to vector<2x16x128xf32>
    %46 = arith.select %26, %44, %45 : vector<2x16x128xi1>, vector<2x16x128xf32>
    %cst_14 = arith.constant 0.606530666 : f32
    %47 = vector.broadcast %cst_14 : f32 to vector<2x16x128xf32>
    %48 = arith.mulf %47, %46 : vector<2x16x128xf32>
    %49 = arith.addf %43, %48 : vector<2x16x128xf32>
    %c127_i32 = arith.constant 127 : i32
    %50 = tpu.dynamic_rotate %0 by %c127_i32 dim 2 : vector<2x16x128xf32>, i32 -> vector<2x16x128xf32>
    %cst_15 = arith.constant 0.000000e+00 : f32
    %51 = vector.broadcast %cst_15 : f32 to vector<2x16x128xf32>
    %52 = arith.select %28, %50, %51 : vector<2x16x128xi1>, vector<2x16x128xf32>
    %cst_16 = arith.constant 0.606530666 : f32
    %53 = vector.broadcast %cst_16 : f32 to vector<2x16x128xf32>
    %54 = arith.mulf %53, %52 : vector<2x16x128xf32>
    %55 = arith.addf %49, %54 : vector<2x16x128xf32>
    %c126_i32 = arith.constant 126 : i32
    %56 = tpu.dynamic_rotate %0 by %c126_i32 dim 2 : vector<2x16x128xf32>, i32 -> vector<2x16x128xf32>
    %cst_17 = arith.constant 0.000000e+00 : f32
    %57 = vector.broadcast %cst_17 : f32 to vector<2x16x128xf32>
    %58 = arith.select %30, %56, %57 : vector<2x16x128xi1>, vector<2x16x128xf32>
    %cst_18 = arith.constant 0.135335281 : f32
    %59 = vector.broadcast %cst_18 : f32 to vector<2x16x128xf32>
    %60 = arith.mulf %59, %58 : vector<2x16x128xf32>
    %61 = arith.addf %55, %60 : vector<2x16x128xf32>
    %cst_19 = arith.constant 1.000000e+00 : f32
    %62 = vector.broadcast %cst_19 : f32 to vector<2x16x128xf32>
    %63 = arith.mulf %62, %61 : vector<2x16x128xf32>
    %c2_i32_20 = arith.constant 2 : i32
    %64 = tpu.dynamic_rotate %61 by %c2_i32_20 dim 1 : vector<2x16x128xf32>, i32 -> vector<2x16x128xf32>
    %cst_21 = arith.constant 0.000000e+00 : f32
    %65 = vector.broadcast %cst_21 : f32 to vector<2x16x128xf32>
    %66 = arith.select %7, %64, %65 : vector<2x16x128xi1>, vector<2x16x128xf32>
    %cst_22 = arith.constant 0.135335281 : f32
    %67 = vector.broadcast %cst_22 : f32 to vector<2x16x128xf32>
    %68 = arith.mulf %67, %66 : vector<2x16x128xf32>
    %69 = arith.addf %63, %68 : vector<2x16x128xf32>
    %c1_i32_23 = arith.constant 1 : i32
    %70 = tpu.dynamic_rotate %61 by %c1_i32_23 dim 1 : vector<2x16x128xf32>, i32 -> vector<2x16x128xf32>
    %cst_24 = arith.constant 0.000000e+00 : f32
    %71 = vector.broadcast %cst_24 : f32 to vector<2x16x128xf32>
    %72 = arith.select %12, %70, %71 : vector<2x16x128xi1>, vector<2x16x128xf32>
    %cst_25 = arith.constant 0.606530666 : f32
    %73 = vector.broadcast %cst_25 : f32 to vector<2x16x128xf32>
    %74 = arith.mulf %73, %72 : vector<2x16x128xf32>
    %75 = arith.addf %69, %74 : vector<2x16x128xf32>
    %c15_i32_26 = arith.constant 15 : i32
    %76 = tpu.dynamic_rotate %61 by %c15_i32_26 dim 1 : vector<2x16x128xf32>, i32 -> vector<2x16x128xf32>
    %cst_27 = arith.constant 0.000000e+00 : f32
    %77 = vector.broadcast %cst_27 : f32 to vector<2x16x128xf32>
    %78 = arith.select %14, %76, %77 : vector<2x16x128xi1>, vector<2x16x128xf32>
    %cst_28 = arith.constant 0.606530666 : f32
    %79 = vector.broadcast %cst_28 : f32 to vector<2x16x128xf32>
    %80 = arith.mulf %79, %78 : vector<2x16x128xf32>
    %81 = arith.addf %75, %80 : vector<2x16x128xf32>
    %c14_i32_29 = arith.constant 14 : i32
    %82 = tpu.dynamic_rotate %61 by %c14_i32_29 dim 1 : vector<2x16x128xf32>, i32 -> vector<2x16x128xf32>
    %cst_30 = arith.constant 0.000000e+00 : f32
    %83 = vector.broadcast %cst_30 : f32 to vector<2x16x128xf32>
    %84 = arith.select %16, %82, %83 : vector<2x16x128xi1>, vector<2x16x128xf32>
    %cst_31 = arith.constant 0.135335281 : f32
    %85 = vector.broadcast %cst_31 : f32 to vector<2x16x128xf32>
    %86 = arith.mulf %85, %84 : vector<2x16x128xf32>
    %87 = arith.addf %81, %86 : vector<2x16x128xf32>
    %c1_i32_32 = arith.constant 1 : i32
    %88 = tpu.dynamic_rotate %87 by %c1_i32_32 dim 2 : vector<2x16x128xf32>, i32 -> vector<2x16x128xf32>
    %cst_33 = arith.constant 0.000000e+00 : f32
    %89 = vector.broadcast %cst_33 : f32 to vector<2x16x128xf32>
    %90 = arith.select %26, %88, %89 : vector<2x16x128xi1>, vector<2x16x128xf32>
    %c127_i32_34 = arith.constant 127 : i32
    %91 = tpu.dynamic_rotate %87 by %c127_i32_34 dim 2 : vector<2x16x128xf32>, i32 -> vector<2x16x128xf32>
    %cst_35 = arith.constant 0.000000e+00 : f32
    %92 = vector.broadcast %cst_35 : f32 to vector<2x16x128xf32>
    %93 = arith.select %28, %91, %92 : vector<2x16x128xi1>, vector<2x16x128xf32>
    %94 = arith.subf %90, %93 : vector<2x16x128xf32>
    %cst_36 = arith.constant 2.000000e+00 : f32
    %95 = vector.broadcast %cst_36 : f32 to vector<2x16x128xf32>
    %96 = arith.mulf %95, %94 : vector<2x16x128xf32>
    %c1_i32_37 = arith.constant 1 : i32
    %97 = tpu.dynamic_rotate %94 by %c1_i32_37 dim 1 : vector<2x16x128xf32>, i32 -> vector<2x16x128xf32>
    %cst_38 = arith.constant 0.000000e+00 : f32
    %98 = vector.broadcast %cst_38 : f32 to vector<2x16x128xf32>
    %99 = arith.select %12, %97, %98 : vector<2x16x128xi1>, vector<2x16x128xf32>
    %100 = arith.addf %96, %99 : vector<2x16x128xf32>
    %c15_i32_39 = arith.constant 15 : i32
    %101 = tpu.dynamic_rotate %94 by %c15_i32_39 dim 1 : vector<2x16x128xf32>, i32 -> vector<2x16x128xf32>
    %cst_40 = arith.constant 0.000000e+00 : f32
    %102 = vector.broadcast %cst_40 : f32 to vector<2x16x128xf32>
    %103 = arith.select %14, %101, %102 : vector<2x16x128xi1>, vector<2x16x128xf32>
    %104 = arith.addf %100, %103 : vector<2x16x128xf32>
    %c1_i32_41 = arith.constant 1 : i32
    %105 = tpu.dynamic_rotate %87 by %c1_i32_41 dim 1 : vector<2x16x128xf32>, i32 -> vector<2x16x128xf32>
    %cst_42 = arith.constant 0.000000e+00 : f32
    %106 = vector.broadcast %cst_42 : f32 to vector<2x16x128xf32>
    %107 = arith.select %12, %105, %106 : vector<2x16x128xi1>, vector<2x16x128xf32>
    %c15_i32_43 = arith.constant 15 : i32
    %108 = tpu.dynamic_rotate %87 by %c15_i32_43 dim 1 : vector<2x16x128xf32>, i32 -> vector<2x16x128xf32>
    %cst_44 = arith.constant 0.000000e+00 : f32
    %109 = vector.broadcast %cst_44 : f32 to vector<2x16x128xf32>
    %110 = arith.select %14, %108, %109 : vector<2x16x128xi1>, vector<2x16x128xf32>
    %111 = arith.subf %107, %110 : vector<2x16x128xf32>
    %cst_45 = arith.constant 2.000000e+00 : f32
    %112 = vector.broadcast %cst_45 : f32 to vector<2x16x128xf32>
    %113 = arith.mulf %112, %111 : vector<2x16x128xf32>
    %c1_i32_46 = arith.constant 1 : i32
    %114 = tpu.dynamic_rotate %111 by %c1_i32_46 dim 2 : vector<2x16x128xf32>, i32 -> vector<2x16x128xf32>
    %cst_47 = arith.constant 0.000000e+00 : f32
    %115 = vector.broadcast %cst_47 : f32 to vector<2x16x128xf32>
    %116 = arith.select %26, %114, %115 : vector<2x16x128xi1>, vector<2x16x128xf32>
    %117 = arith.addf %113, %116 : vector<2x16x128xf32>
    %c127_i32_48 = arith.constant 127 : i32
    %118 = tpu.dynamic_rotate %111 by %c127_i32_48 dim 2 : vector<2x16x128xf32>, i32 -> vector<2x16x128xf32>
    %cst_49 = arith.constant 0.000000e+00 : f32
    %119 = vector.broadcast %cst_49 : f32 to vector<2x16x128xf32>
    %120 = arith.select %28, %118, %119 : vector<2x16x128xi1>, vector<2x16x128xf32>
    %121 = arith.addf %117, %120 : vector<2x16x128xf32>
    %122 = arith.mulf %104, %104 : vector<2x16x128xf32>
    %123 = arith.mulf %121, %121 : vector<2x16x128xf32>
    %124 = arith.addf %122, %123 : vector<2x16x128xf32>
    %125 = math.sqrt %124 : vector<2x16x128xf32>
    %cst_50 = arith.constant 0.000000e+00 : f32
    %126 = vector.broadcast %cst_50 : f32 to vector<2x16x128xf32>
    %127 = arith.select %35, %125, %126 : vector<2x16x128xi1>, vector<2x16x128xf32>
    %cst_51 = arith.constant dense<0xFF800000> : vector<2x128xf32>
    %128 = vector.multi_reduction <maximumf>, %127, %cst_51 [1] : vector<2x16x128xf32> to vector<2x128xf32>
    %129 = vector.shape_cast %128 : vector<2x128xf32> to vector<2x1x128xf32>
    %cst_52 = arith.constant dense<0xFF800000> : vector<2x1xf32>
    %130 = vector.multi_reduction <maximumf>, %129, %cst_52 [2] : vector<2x1x128xf32> to vector<2x1xf32>
    %131 = vector.shape_cast %130 : vector<2x1xf32> to vector<2x1x1xf32>
    %132 = tpu.reciprocal %131 : vector<2x1x1xf32> -> vector<2x1x1xf32>
    %cst_53 = arith.constant 2.550000e+02 : f32
    %133 = vector.broadcast %cst_53 : f32 to vector<2x1x1xf32>
    %134 = arith.mulf %133, %132 : vector<2x1x1xf32>
    %cst_54 = arith.constant -0.923878669 : f32
    %135 = vector.broadcast %cst_54 : f32 to vector<2x16x128xf32>
    %136 = arith.mulf %135, %121 : vector<2x16x128xf32>
    %cst_55 = arith.constant -0.382685572 : f32
    %137 = vector.broadcast %cst_55 : f32 to vector<2x16x128xf32>
    %138 = arith.mulf %137, %104 : vector<2x16x128xf32>
    %139 = arith.subf %136, %138 : vector<2x16x128xf32>
    %c0_i32 = arith.constant 0 : i32
    %140 = vector.broadcast %c0_i32 : i32 to vector<2x16x128xi32>
    %cst_56 = arith.constant -0.382681906 : f32
    %141 = vector.broadcast %cst_56 : f32 to vector<2x16x128xf32>
    %142 = arith.mulf %141, %121 : vector<2x16x128xf32>
    %cst_57 = arith.constant -0.923880159 : f32
    %143 = vector.broadcast %cst_57 : f32 to vector<2x16x128xf32>
    %144 = arith.mulf %143, %104 : vector<2x16x128xf32>
    %145 = arith.subf %142, %144 : vector<2x16x128xf32>
    %cst_58 = arith.constant 0.000000e+00 : f32
    %146 = vector.broadcast %cst_58 : f32 to vector<2x16x128xf32>
    %147 = arith.cmpf oge, %139, %146 : vector<2x16x128xf32>
    %cst_59 = arith.constant 0.000000e+00 : f32
    %148 = vector.broadcast %cst_59 : f32 to vector<2x16x128xf32>
    %149 = arith.cmpf olt, %145, %148 : vector<2x16x128xf32>
    %150 = arith.andi %147, %149 : vector<2x16x128xi1>
    %c1_i32_60 = arith.constant 1 : i32
    %151 = vector.broadcast %c1_i32_60 : i32 to vector<2x16x128xi32>
    %152 = arith.select %150, %151, %140 : vector<2x16x128xi1>, vector<2x16x128xi32>
    %cst_61 = arith.constant 0.38268435 : f32
    %153 = vector.broadcast %cst_61 : f32 to vector<2x16x128xf32>
    %154 = arith.mulf %153, %121 : vector<2x16x128xf32>
    %cst_62 = arith.constant -0.923879146 : f32
    %155 = vector.broadcast %cst_62 : f32 to vector<2x16x128xf32>
    %156 = arith.mulf %155, %104 : vector<2x16x128xf32>
    %157 = arith.subf %154, %156 : vector<2x16x128xf32>
    %cst_63 = arith.constant 0.000000e+00 : f32
    %158 = vector.broadcast %cst_63 : f32 to vector<2x16x128xf32>
    %159 = arith.cmpf oge, %145, %158 : vector<2x16x128xf32>
    %cst_64 = arith.constant 0.000000e+00 : f32
    %160 = vector.broadcast %cst_64 : f32 to vector<2x16x128xf32>
    %161 = arith.cmpf olt, %157, %160 : vector<2x16x128xf32>
    %162 = arith.andi %159, %161 : vector<2x16x128xi1>
    %c2_i32_65 = arith.constant 2 : i32
    %163 = vector.broadcast %c2_i32_65 : i32 to vector<2x16x128xi32>
    %164 = arith.select %162, %163, %152 : vector<2x16x128xi1>, vector<2x16x128xi32>
    %cst_66 = arith.constant 0.923879683 : f32
    %165 = vector.broadcast %cst_66 : f32 to vector<2x16x128xf32>
    %166 = arith.mulf %165, %121 : vector<2x16x128xf32>
    %cst_67 = arith.constant -0.382683128 : f32
    %167 = vector.broadcast %cst_67 : f32 to vector<2x16x128xf32>
    %168 = arith.mulf %167, %104 : vector<2x16x128xf32>
    %169 = arith.subf %166, %168 : vector<2x16x128xf32>
    %cst_68 = arith.constant 0.000000e+00 : f32
    %170 = vector.broadcast %cst_68 : f32 to vector<2x16x128xf32>
    %171 = arith.cmpf oge, %157, %170 : vector<2x16x128xf32>
    %cst_69 = arith.constant 0.000000e+00 : f32
    %172 = vector.broadcast %cst_69 : f32 to vector<2x16x128xf32>
    %173 = arith.cmpf olt, %169, %172 : vector<2x16x128xf32>
    %174 = arith.andi %171, %173 : vector<2x16x128xi1>
    %c3_i32 = arith.constant 3 : i32
    %175 = vector.broadcast %c3_i32 : i32 to vector<2x16x128xi32>
    %176 = arith.select %174, %175, %164 : vector<2x16x128xi1>, vector<2x16x128xi32>
    %cst_70 = arith.constant 0.923879683 : f32
    %177 = vector.broadcast %cst_70 : f32 to vector<2x16x128xf32>
    %178 = arith.mulf %177, %121 : vector<2x16x128xf32>
    %cst_71 = arith.constant 0.382683128 : f32
    %179 = vector.broadcast %cst_71 : f32 to vector<2x16x128xf32>
    %180 = arith.mulf %179, %104 : vector<2x16x128xf32>
    %181 = arith.subf %178, %180 : vector<2x16x128xf32>
    %cst_72 = arith.constant 0.000000e+00 : f32
    %182 = vector.broadcast %cst_72 : f32 to vector<2x16x128xf32>
    %183 = arith.cmpf oge, %169, %182 : vector<2x16x128xf32>
    %cst_73 = arith.constant 0.000000e+00 : f32
    %184 = vector.broadcast %cst_73 : f32 to vector<2x16x128xf32>
    %185 = arith.cmpf olt, %181, %184 : vector<2x16x128xf32>
    %186 = arith.andi %183, %185 : vector<2x16x128xi1>
    %c4_i32 = arith.constant 4 : i32
    %187 = vector.broadcast %c4_i32 : i32 to vector<2x16x128xi32>
    %188 = arith.select %186, %187, %176 : vector<2x16x128xi1>, vector<2x16x128xi32>
    %cst_74 = arith.constant 0.38268435 : f32
    %189 = vector.broadcast %cst_74 : f32 to vector<2x16x128xf32>
    %190 = arith.mulf %189, %121 : vector<2x16x128xf32>
    %cst_75 = arith.constant 0.923879146 : f32
    %191 = vector.broadcast %cst_75 : f32 to vector<2x16x128xf32>
    %192 = arith.mulf %191, %104 : vector<2x16x128xf32>
    %193 = arith.subf %190, %192 : vector<2x16x128xf32>
    %cst_76 = arith.constant 0.000000e+00 : f32
    %194 = vector.broadcast %cst_76 : f32 to vector<2x16x128xf32>
    %195 = arith.cmpf oge, %181, %194 : vector<2x16x128xf32>
    %cst_77 = arith.constant 0.000000e+00 : f32
    %196 = vector.broadcast %cst_77 : f32 to vector<2x16x128xf32>
    %197 = arith.cmpf olt, %193, %196 : vector<2x16x128xf32>
    %198 = arith.andi %195, %197 : vector<2x16x128xi1>
    %c5_i32 = arith.constant 5 : i32
    %199 = vector.broadcast %c5_i32 : i32 to vector<2x16x128xi32>
    %200 = arith.select %198, %199, %188 : vector<2x16x128xi1>, vector<2x16x128xi32>
    %cst_78 = arith.constant -0.382681906 : f32
    %201 = vector.broadcast %cst_78 : f32 to vector<2x16x128xf32>
    %202 = arith.mulf %201, %121 : vector<2x16x128xf32>
    %cst_79 = arith.constant 0.923880159 : f32
    %203 = vector.broadcast %cst_79 : f32 to vector<2x16x128xf32>
    %204 = arith.mulf %203, %104 : vector<2x16x128xf32>
    %205 = arith.subf %202, %204 : vector<2x16x128xf32>
    %cst_80 = arith.constant 0.000000e+00 : f32
    %206 = vector.broadcast %cst_80 : f32 to vector<2x16x128xf32>
    %207 = arith.cmpf oge, %193, %206 : vector<2x16x128xf32>
    %cst_81 = arith.constant 0.000000e+00 : f32
    %208 = vector.broadcast %cst_81 : f32 to vector<2x16x128xf32>
    %209 = arith.cmpf olt, %205, %208 : vector<2x16x128xf32>
    %210 = arith.andi %207, %209 : vector<2x16x128xi1>
    %c6_i32 = arith.constant 6 : i32
    %211 = vector.broadcast %c6_i32 : i32 to vector<2x16x128xi32>
    %212 = arith.select %210, %211, %200 : vector<2x16x128xi1>, vector<2x16x128xi32>
    %cst_82 = arith.constant -0.923878669 : f32
    %213 = vector.broadcast %cst_82 : f32 to vector<2x16x128xf32>
    %214 = arith.mulf %213, %121 : vector<2x16x128xf32>
    %cst_83 = arith.constant 0.382685572 : f32
    %215 = vector.broadcast %cst_83 : f32 to vector<2x16x128xf32>
    %216 = arith.mulf %215, %104 : vector<2x16x128xf32>
    %217 = arith.subf %214, %216 : vector<2x16x128xf32>
    %cst_84 = arith.constant 0.000000e+00 : f32
    %218 = vector.broadcast %cst_84 : f32 to vector<2x16x128xf32>
    %219 = arith.cmpf oge, %205, %218 : vector<2x16x128xf32>
    %cst_85 = arith.constant 0.000000e+00 : f32
    %220 = vector.broadcast %cst_85 : f32 to vector<2x16x128xf32>
    %221 = arith.cmpf olt, %217, %220 : vector<2x16x128xf32>
    %222 = arith.andi %219, %221 : vector<2x16x128xi1>
    %c7_i32 = arith.constant 7 : i32
    %223 = vector.broadcast %c7_i32 : i32 to vector<2x16x128xi32>
    %224 = arith.select %222, %223, %212 : vector<2x16x128xi1>, vector<2x16x128xi32>
    %cst_86 = arith.constant 0.000000e+00 : f32
    %225 = vector.broadcast %cst_86 : f32 to vector<2x16x128xf32>
    %226 = arith.cmpf oeq, %104, %225 : vector<2x16x128xf32>
    %cst_87 = arith.constant 0.000000e+00 : f32
    %227 = vector.broadcast %cst_87 : f32 to vector<2x16x128xf32>
    %228 = arith.cmpf oeq, %121, %227 : vector<2x16x128xf32>
    %229 = arith.andi %226, %228 : vector<2x16x128xi1>
    %c4_i32_88 = arith.constant 4 : i32
    %230 = vector.broadcast %c4_i32_88 : i32 to vector<2x16x128xi32>
    %231 = arith.select %229, %230, %224 : vector<2x16x128xi1>, vector<2x16x128xi32>
    %c4_i32_89 = arith.constant 4 : i32
    %232 = vector.broadcast %c4_i32_89 : i32 to vector<2x16x128xi32>
    %233 = arith.cmpi sge, %231, %232 : vector<2x16x128xi32>
    %c4_i32_90 = arith.constant 4 : i32
    %234 = vector.broadcast %c4_i32_90 : i32 to vector<2x16x128xi32>
    %235 = arith.subi %231, %234 : vector<2x16x128xi32>
    %c4_i32_91 = arith.constant 4 : i32
    %236 = vector.broadcast %c4_i32_91 : i32 to vector<2x16x128xi32>
    %237 = arith.addi %231, %236 : vector<2x16x128xi32>
    %238 = arith.select %233, %235, %237 : vector<2x16x128xi1>, vector<2x16x128xi32>
    %c1_i32_92 = arith.constant 1 : i32
    %239 = tpu.dynamic_rotate %125 by %c1_i32_92 dim 1 : vector<2x16x128xf32>, i32 -> vector<2x16x128xf32>
    %cst_93 = arith.constant 0.000000e+00 : f32
    %240 = vector.broadcast %cst_93 : f32 to vector<2x16x128xf32>
    %241 = arith.select %12, %239, %240 : vector<2x16x128xi1>, vector<2x16x128xf32>
    %c15_i32_94 = arith.constant 15 : i32
    %242 = tpu.dynamic_rotate %125 by %c15_i32_94 dim 1 : vector<2x16x128xf32>, i32 -> vector<2x16x128xf32>
    %cst_95 = arith.constant 0.000000e+00 : f32
    %243 = vector.broadcast %cst_95 : f32 to vector<2x16x128xf32>
    %244 = arith.select %14, %242, %243 : vector<2x16x128xi1>, vector<2x16x128xf32>
    %cst_96 = arith.constant 0.000000e+00 : f32
    %245 = vector.broadcast %cst_96 : f32 to vector<2x16x128xf32>
    %cst_97 = arith.constant 0.000000e+00 : f32
    %246 = vector.broadcast %cst_97 : f32 to vector<2x16x128xf32>
    %c127_i32_98 = arith.constant 127 : i32
    %247 = tpu.dynamic_rotate %125 by %c127_i32_98 dim 2 : vector<2x16x128xf32>, i32 -> vector<2x16x128xf32>
    %cst_99 = arith.constant 0.000000e+00 : f32
    %248 = vector.broadcast %cst_99 : f32 to vector<2x16x128xf32>
    %249 = arith.select %28, %247, %248 : vector<2x16x128xi1>, vector<2x16x128xf32>
    %250 = arith.subf %125, %249 : vector<2x16x128xf32>
    %c0_i32_100 = arith.constant 0 : i32
    %251 = vector.broadcast %c0_i32_100 : i32 to vector<2x16x128xi32>
    %252 = arith.cmpi eq, %231, %251 : vector<2x16x128xi32>
    %253 = arith.select %252, %250, %245 : vector<2x16x128xi1>, vector<2x16x128xf32>
    %c0_i32_101 = arith.constant 0 : i32
    %254 = vector.broadcast %c0_i32_101 : i32 to vector<2x16x128xi32>
    %255 = arith.cmpi eq, %238, %254 : vector<2x16x128xi32>
    %256 = arith.select %255, %250, %246 : vector<2x16x128xi1>, vector<2x16x128xf32>
    %c127_i32_102 = arith.constant 127 : i32
    %257 = tpu.dynamic_rotate %244 by %c127_i32_102 dim 2 : vector<2x16x128xf32>, i32 -> vector<2x16x128xf32>
    %cst_103 = arith.constant 0.000000e+00 : f32
    %258 = vector.broadcast %cst_103 : f32 to vector<2x16x128xf32>
    %259 = arith.select %28, %257, %258 : vector<2x16x128xi1>, vector<2x16x128xf32>
    %260 = arith.subf %125, %259 : vector<2x16x128xf32>
    %c1_i32_104 = arith.constant 1 : i32
    %261 = vector.broadcast %c1_i32_104 : i32 to vector<2x16x128xi32>
    %262 = arith.cmpi eq, %231, %261 : vector<2x16x128xi32>
    %263 = arith.select %262, %260, %253 : vector<2x16x128xi1>, vector<2x16x128xf32>
    %c1_i32_105 = arith.constant 1 : i32
    %264 = vector.broadcast %c1_i32_105 : i32 to vector<2x16x128xi32>
    %265 = arith.cmpi eq, %238, %264 : vector<2x16x128xi32>
    %266 = arith.select %265, %260, %256 : vector<2x16x128xi1>, vector<2x16x128xf32>
    %267 = arith.subf %125, %244 : vector<2x16x128xf32>
    %c2_i32_106 = arith.constant 2 : i32
    %268 = vector.broadcast %c2_i32_106 : i32 to vector<2x16x128xi32>
    %269 = arith.cmpi eq, %231, %268 : vector<2x16x128xi32>
    %270 = arith.select %269, %267, %263 : vector<2x16x128xi1>, vector<2x16x128xf32>
    %c2_i32_107 = arith.constant 2 : i32
    %271 = vector.broadcast %c2_i32_107 : i32 to vector<2x16x128xi32>
    %272 = arith.cmpi eq, %238, %271 : vector<2x16x128xi32>
    %273 = arith.select %272, %267, %266 : vector<2x16x128xi1>, vector<2x16x128xf32>
    %c1_i32_108 = arith.constant 1 : i32
    %274 = tpu.dynamic_rotate %244 by %c1_i32_108 dim 2 : vector<2x16x128xf32>, i32 -> vector<2x16x128xf32>
    %cst_109 = arith.constant 0.000000e+00 : f32
    %275 = vector.broadcast %cst_109 : f32 to vector<2x16x128xf32>
    %276 = arith.select %26, %274, %275 : vector<2x16x128xi1>, vector<2x16x128xf32>
    %277 = arith.subf %125, %276 : vector<2x16x128xf32>
    %c3_i32_110 = arith.constant 3 : i32
    %278 = vector.broadcast %c3_i32_110 : i32 to vector<2x16x128xi32>
    %279 = arith.cmpi eq, %231, %278 : vector<2x16x128xi32>
    %280 = arith.select %279, %277, %270 : vector<2x16x128xi1>, vector<2x16x128xf32>
    %c3_i32_111 = arith.constant 3 : i32
    %281 = vector.broadcast %c3_i32_111 : i32 to vector<2x16x128xi32>
    %282 = arith.cmpi eq, %238, %281 : vector<2x16x128xi32>
    %283 = arith.select %282, %277, %273 : vector<2x16x128xi1>, vector<2x16x128xf32>
    %c1_i32_112 = arith.constant 1 : i32
    %284 = tpu.dynamic_rotate %125 by %c1_i32_112 dim 2 : vector<2x16x128xf32>, i32 -> vector<2x16x128xf32>
    %cst_113 = arith.constant 0.000000e+00 : f32
    %285 = vector.broadcast %cst_113 : f32 to vector<2x16x128xf32>
    %286 = arith.select %26, %284, %285 : vector<2x16x128xi1>, vector<2x16x128xf32>
    %287 = arith.subf %125, %286 : vector<2x16x128xf32>
    %c4_i32_114 = arith.constant 4 : i32
    %288 = vector.broadcast %c4_i32_114 : i32 to vector<2x16x128xi32>
    %289 = arith.cmpi eq, %231, %288 : vector<2x16x128xi32>
    %290 = arith.select %289, %287, %280 : vector<2x16x128xi1>, vector<2x16x128xf32>
    %c4_i32_115 = arith.constant 4 : i32
    %291 = vector.broadcast %c4_i32_115 : i32 to vector<2x16x128xi32>
    %292 = arith.cmpi eq, %238, %291 : vector<2x16x128xi32>
    %293 = arith.select %292, %287, %283 : vector<2x16x128xi1>, vector<2x16x128xf32>
    %c1_i32_116 = arith.constant 1 : i32
    %294 = tpu.dynamic_rotate %241 by %c1_i32_116 dim 2 : vector<2x16x128xf32>, i32 -> vector<2x16x128xf32>
    %cst_117 = arith.constant 0.000000e+00 : f32
    %295 = vector.broadcast %cst_117 : f32 to vector<2x16x128xf32>
    %296 = arith.select %26, %294, %295 : vector<2x16x128xi1>, vector<2x16x128xf32>
    %297 = arith.subf %125, %296 : vector<2x16x128xf32>
    %c5_i32_118 = arith.constant 5 : i32
    %298 = vector.broadcast %c5_i32_118 : i32 to vector<2x16x128xi32>
    %299 = arith.cmpi eq, %231, %298 : vector<2x16x128xi32>
    %300 = arith.select %299, %297, %290 : vector<2x16x128xi1>, vector<2x16x128xf32>
    %c5_i32_119 = arith.constant 5 : i32
    %301 = vector.broadcast %c5_i32_119 : i32 to vector<2x16x128xi32>
    %302 = arith.cmpi eq, %238, %301 : vector<2x16x128xi32>
    %303 = arith.select %302, %297, %293 : vector<2x16x128xi1>, vector<2x16x128xf32>
    %304 = arith.subf %125, %241 : vector<2x16x128xf32>
    %c6_i32_120 = arith.constant 6 : i32
    %305 = vector.broadcast %c6_i32_120 : i32 to vector<2x16x128xi32>
    %306 = arith.cmpi eq, %231, %305 : vector<2x16x128xi32>
    %307 = arith.select %306, %304, %300 : vector<2x16x128xi1>, vector<2x16x128xf32>
    %c6_i32_121 = arith.constant 6 : i32
    %308 = vector.broadcast %c6_i32_121 : i32 to vector<2x16x128xi32>
    %309 = arith.cmpi eq, %238, %308 : vector<2x16x128xi32>
    %310 = arith.select %309, %304, %303 : vector<2x16x128xi1>, vector<2x16x128xf32>
    %c127_i32_122 = arith.constant 127 : i32
    %311 = tpu.dynamic_rotate %241 by %c127_i32_122 dim 2 : vector<2x16x128xf32>, i32 -> vector<2x16x128xf32>
    %cst_123 = arith.constant 0.000000e+00 : f32
    %312 = vector.broadcast %cst_123 : f32 to vector<2x16x128xf32>
    %313 = arith.select %28, %311, %312 : vector<2x16x128xi1>, vector<2x16x128xf32>
    %314 = arith.subf %125, %313 : vector<2x16x128xf32>
    %c7_i32_124 = arith.constant 7 : i32
    %315 = vector.broadcast %c7_i32_124 : i32 to vector<2x16x128xi32>
    %316 = arith.cmpi eq, %231, %315 : vector<2x16x128xi32>
    %317 = arith.select %316, %314, %307 : vector<2x16x128xi1>, vector<2x16x128xf32>
    %c7_i32_125 = arith.constant 7 : i32
    %318 = vector.broadcast %c7_i32_125 : i32 to vector<2x16x128xi32>
    %319 = arith.cmpi eq, %238, %318 : vector<2x16x128xi32>
    %320 = arith.select %319, %314, %310 : vector<2x16x128xi1>, vector<2x16x128xf32>
    %321 = arith.minimumf %317, %320 : vector<2x16x128xf32>
    %cst_126 = arith.constant 0.000000e+00 : f32
    %322 = vector.broadcast %cst_126 : f32 to vector<2x16x128xf32>
    %323 = arith.cmpf ogt, %321, %322 : vector<2x16x128xf32>
    %324 = vector.broadcast %134 : vector<2x1x1xf32> to vector<2x16x128xf32>
    %325 = arith.mulf %125, %324 : vector<2x16x128xf32>
    %cst_127 = arith.constant 0.000000e+00 : f32
    %326 = vector.broadcast %cst_127 : f32 to vector<2x16x128xf32>
    %327 = arith.select %323, %325, %326 : vector<2x16x128xi1>, vector<2x16x128xf32>
    %c0_128 = arith.constant 0 : index
    %c0_129 = arith.constant 0 : index
    %c0_130 = arith.constant 0 : index
    %328 = vector.load %arg2[%c0_128, %c0_129, %c0_130] : memref<2x16x128xf32, #tpu.memory_space<vmem>>, vector<2x16x128xf32>
    tpu.vector_store %arg2[%c0_128, %c0_129, %c0_130], %327 {strides = array<i32>} : memref<2x16x128xf32, #tpu.memory_space<vmem>>, vector<2x16x128xf32>,
    return
  }
  func.func @transform_0(%arg0: i32) -> (i32, i32, i32) {
    %c0_i32 = arith.constant 0 : i32
    %c0_i32_0 = arith.constant 0 : i32
    %c0_i32_1 = arith.constant 0 : i32
    return %arg0, %c0_i32, %c0_i32_0 : i32, i32, i32
  }
  func.func @transform_1(%arg0: i32) -> (i32, i32, i32) {
    %c0_i32 = arith.constant 0 : i32
    %c0_i32_0 = arith.constant 0 : i32
    %c0_i32_1 = arith.constant 0 : i32
    return %arg0, %c0_i32, %c0_i32_0 : i32, i32, i32
  }
}

</mosaic_0001>

<llo_original>
// kernel: tpu_custom_call.1
$region0: #{tpu_custom_call.1}
  #allocation0 [shape = 'u32[]', space=smem, size = 0x4, offset = 0x4, fixed_abs, tag = 'smem constant byte address 0x4 - core index']
  #allocation1 [shape = 'u32[144,128]{1,0:T(1,128)}', space=vmem, size = 0x12000, scoped, tag = 'internal scratch']
  %s0 = inlined_call_operand.hbm [shape: f32[2,16,128], index: 0, kind: input, shape index: {}]
  %s1 = inlined_call_operand.hbm [shape: f32[2,16,128], index: 1, kind: output, shape index: {}]
  %s2 = sld [smem:[#allocation0]]
  $region18: #{tpu_custom_call.1} parent=0
    _
  %s4 = ssub.s32 1, %s2
  %s5 = scalar_select 0, %s4, %s2
  $region1: #{tpu_custom_call.1} parent=0
    #allocation2 [shape = 'u8[16384]{0}', space=vmem, size = 0x4000, scoped, tag = 'input window, operand 0, single buffered']
    #allocation3 [shape = 's32[1]{0}', space=sflag, size = 0x4, scoped, tag = 'scoped memory for tpu_custom_call.1']
    #allocation4 [shape = 's32[1]{0}', space=sflag, size = 0x4, scoped, tag = 'scoped memory for tpu_custom_call.1']
    #allocation5 [shape = 'u8[16384]{0}', space=vmem, size = 0x4000, scoped, tag = 'output window, operand 0, single buffered']
    %6 = vsyncpa [#allocation3], 0
    %7 = vsyncpa [#allocation4], 0
    // Predicated region
    $region2: #{tpu_custom_call.1} parent=1 // pred_check
      _
    $region3: #{tpu_custom_call.1} parent=1 // pred_check_branch
      %9 = sbr.rel (0) target = $region5
    $region4: #{tpu_custom_call.1} parent=1 // pred_region
      %s11 = ssub.s32 512, 512
      %12 = vsyncadd [#allocation3], %s11
      %s13 = sshll.u32 [#allocation2], 4
      %s14 = int_to_ptr.vmem [resolvable:$true] %s13
      %19 = dma.hbm_to_vmem [thread:$0]  %s0, 512, %s14, [#allocation3], 128, 128, 8
    $region5: #{tpu_custom_call.1} parent=1 // pred_fallthru
      _
    // Predicated region
    $region6: #{tpu_custom_call.1} parent=1 // pred_check
      _
    $region7: #{tpu_custom_call.1} parent=1 // pred_check_branch
      %21 = sbr.rel (0) target = $region9
    $region8: #{tpu_custom_call.1} parent=1 // pred_region
      %22 = dma.done [#allocation3], 512
    $region9: #{tpu_custom_call.1} parent=1 // pred_fallthru
      _
    %v23 = vld [vmem:[#allocation2] sm:$0xff]
    %v24 = vld [vmem:[#allocation2 + $0x8] sm:$0xff]
    %v25 = vld [vmem:[#allocation2 + $0x10] sm:$0xff]
    %v26 = vld [vmem:[#allocation2 + $0x18] sm:$0xff]
    %v27 = vlaneseq
    %v28 = vshrl.u32 %v27, 7
    %v29 = vadd.s32 %v28, 8
    %v30 = vlaneseq
    %v31 = vand.u32 %v30, 127
    %vm32 = vcmp.lt.s32.totalorder %v28, 18
    %vm33 = vcmp.lt.s32.totalorder %v29, 18
    %vm34 = vcmp.ge.s32.totalorder %v28, 2
    %vm35 = vcmp.ge.s32.totalorder %v29, 2
    %vm36 = vmand %vm32, %vm34
    %vm37 = vmand %vm33, %vm35
    %vm38 = vcmp.lt.s32.totalorder %v28, 17
    %vm39 = vcmp.lt.s32.totalorder %v29, 17
    %vm40 = vcmp.ge.s32.totalorder %v28, 1
    %vm41 = vcmp.ge.s32.totalorder %v29, 1
    %vm42 = vmand %vm38, %vm40
    %vm43 = vmand %vm39, %vm41
    %vm44 = vcmp.lt.s32.totalorder %v28, 15
    %vm45 = vcmp.lt.s32.totalorder %v29, 15
    %vm46 = vcmp.lt.s32.totalorder %v28, 14
    %vm47 = vcmp.lt.s32.totalorder %v29, 14
    %vm48 = vcmp.lt.s32.totalorder %v31, 18
    %vm49 = vcmp.ge.s32.totalorder %v31, 2
    %vm50 = vmand %vm48, %vm49
    %vm51 = vcmp.lt.s32.totalorder %v31, 17
    %vm52 = vcmp.ge.s32.totalorder %v31, 1
    %vm53 = vmand %vm51, %vm52
    %vm54 = vcmp.lt.s32.totalorder %v31, 15
    %vm55 = vcmp.lt.s32.totalorder %v31, 14
    %vm56 = vcmp.lt.s32.totalorder %v28, 16
    %vm57 = vcmp.lt.s32.totalorder %v29, 16
    %vm58 = vcmp.lt.s32.totalorder %v31, 16
    %vm59 = vmand %vm56, %vm58
    %vm60 = vmand %vm57, %vm58
    %61 = vrot.lane.b32.xlu0 %v23, 2
    %v62 = vpop.permute.xlu0 %61
    %63 = vrot.lane.b32.xlu0 %v24, 2
    %v64 = vpop.permute.xlu0 %63
    %65 = vrot.lane.b32.xlu0 %v25, 2
    %v66 = vpop.permute.xlu0 %65
    %67 = vrot.lane.b32.xlu0 %v26, 2
    %v68 = vpop.permute.xlu0 %67
    %v69 = vsel %vm50, %v62, 0.0
    %v70 = vsel %vm50, %v64, 0.0
    %v71 = vsel %vm50, %v66, 0.0
    %v72 = vsel %vm50, %v68, 0.0
    %v73 = vmul.f32 %v69, 0.13533528
    %v74 = vmul.f32 %v70, 0.13533528
    %v75 = vmul.f32 %v71, 0.13533528
    %v76 = vmul.f32 %v72, 0.13533528
    %v77 = vadd.f32 %v23, %v73
    %v78 = vadd.f32 %v24, %v74
    %v79 = vadd.f32 %v25, %v75
    %v80 = vadd.f32 %v26, %v76
    %81 = vrot.lane.b32.xlu0 %v23, 1
    %v82 = vpop.permute.xlu0 %81
    %83 = vrot.lane.b32.xlu0 %v24, 1
    %v84 = vpop.permute.xlu0 %83
    %85 = vrot.lane.b32.xlu0 %v25, 1
    %v86 = vpop.permute.xlu0 %85
    %87 = vrot.lane.b32.xlu0 %v26, 1
    %v88 = vpop.permute.xlu0 %87
    %v89 = vsel %vm53, %v82, 0.0
    %v90 = vsel %vm53, %v84, 0.0
    %v91 = vsel %vm53, %v86, 0.0
    %v92 = vsel %vm53, %v88, 0.0
    %v93 = vmul.f32 %v89, 0.60653067
    %v94 = vmul.f32 %v90, 0.60653067
    %v95 = vmul.f32 %v91, 0.60653067
    %v96 = vmul.f32 %v92, 0.60653067
    %v97 = vadd.f32 %v77, %v93
    %v98 = vadd.f32 %v78, %v94
    %v99 = vadd.f32 %v79, %v95
    %v100 = vadd.f32 %v80, %v96
    %101 = vrot.lane.b32.xlu0 %v23, 127
    %v102 = vpop.permute.xlu0 %101
    %103 = vrot.lane.b32.xlu0 %v24, 127
    %v104 = vpop.permute.xlu0 %103
    %105 = vrot.lane.b32.xlu0 %v25, 127
    %v106 = vpop.permute.xlu0 %105
    %107 = vrot.lane.b32.xlu0 %v26, 127
    %v108 = vpop.permute.xlu0 %107
    %v109 = vsel %vm54, %v102, 0.0
    %v110 = vsel %vm54, %v104, 0.0
    %v111 = vsel %vm54, %v106, 0.0
    %v112 = vsel %vm54, %v108, 0.0
    %v113 = vmul.f32 %v109, 0.60653067
    %v114 = vmul.f32 %v110, 0.60653067
    %v115 = vmul.f32 %v111, 0.60653067
    %v116 = vmul.f32 %v112, 0.60653067
    %v117 = vadd.f32 %v97, %v113
    %v118 = vadd.f32 %v98, %v114
    %v119 = vadd.f32 %v99, %v115
    %v120 = vadd.f32 %v100, %v116
    %121 = vrot.lane.b32.xlu0 %v23, 126
    %v122 = vpop.permute.xlu0 %121
    %123 = vrot.lane.b32.xlu0 %v24, 126
    %v124 = vpop.permute.xlu0 %123
    %125 = vrot.lane.b32.xlu0 %v25, 126
    %v126 = vpop.permute.xlu0 %125
    %127 = vrot.lane.b32.xlu0 %v26, 126
    %v128 = vpop.permute.xlu0 %127
    %v129 = vsel %vm55, %v122, 0.0
    %v130 = vsel %vm55, %v124, 0.0
    %v131 = vsel %vm55, %v126, 0.0
    %v132 = vsel %vm55, %v128, 0.0
    %v133 = vmul.f32 %v129, 0.13533528
    %v134 = vmul.f32 %v130, 0.13533528
    %v135 = vmul.f32 %v131, 0.13533528
    %v136 = vmul.f32 %v132, 0.13533528
    %v137 = vadd.f32 %v117, %v133
    %v138 = vadd.f32 %v118, %v134
    %v139 = vadd.f32 %v119, %v135
    %v140 = vadd.f32 %v120, %v136
    %v141 = vrot.slane %v137, 6
    %v142 = vrot.slane %v139, 6
    %v143 = vrot.slane %v138, 6
    %v144 = vrot.slane %v140, 6
    %vm145 = vcmp.lt.s32.totalorder %v28, 2
    %v146 = vsel %vm145, %v141, %v143
    %v147 = vsel %vm145, %v142, %v144
    %v148 = vsel %vm145, %v143, %v141
    %v149 = vsel %vm145, %v144, %v142
    %v150 = vsel %vm36, %v148, 0.0
    %v151 = vsel %vm37, %v146, 0.0
    %v152 = vsel %vm36, %v149, 0.0
    %v153 = vsel %vm37, %v147, 0.0
    %v154 = vmul.f32 %v150, 0.13533528
    %v155 = vmul.f32 %v151, 0.13533528
    %v156 = vmul.f32 %v152, 0.13533528
    %v157 = vmul.f32 %v153, 0.13533528
    %v158 = vadd.f32 %v137, %v154
    %v159 = vadd.f32 %v138, %v155
    %v160 = vadd.f32 %v139, %v156
    %v161 = vadd.f32 %v140, %v157
    %v162 = vrot.slane %v137, 7
    %v163 = vrot.slane %v139, 7
    %v164 = vrot.slane %v138, 7
    %v165 = vrot.slane %v140, 7
    %vm166 = vcmp.lt.s32.totalorder %v28, 1
    %v167 = vsel %vm166, %v162, %v164
    %v168 = vsel %vm166, %v163, %v165
    %v169 = vsel %vm166, %v164, %v162
    %v170 = vsel %vm166, %v165, %v163
    %v171 = vsel %vm42, %v169, 0.0
    %v172 = vsel %vm43, %v167, 0.0
    %v173 = vsel %vm42, %v170, 0.0
    %v174 = vsel %vm43, %v168, 0.0
    %v175 = vmul.f32 %v171, 0.60653067
    %v176 = vmul.f32 %v172, 0.60653067
    %v177 = vmul.f32 %v173, 0.60653067
    %v178 = vmul.f32 %v174, 0.60653067
    %v179 = vadd.f32 %v158, %v175
    %v180 = vadd.f32 %v159, %v176
    %v181 = vadd.f32 %v160, %v177
    %v182 = vadd.f32 %v161, %v178
    %v183 = vrot.slane %v137, 1
    %v184 = vrot.slane %v139, 1
    %v185 = vrot.slane %v138, 1
    %v186 = vrot.slane %v140, 1
    %vm187 = vcmp.lt.s32.totalorder %v28, 7
    %v188 = vsel %vm187, %v183, %v185
    %v189 = vsel %vm187, %v184, %v186
    %v190 = vsel %vm187, %v185, %v183
    %v191 = vsel %vm187, %v186, %v184
    %v192 = vsel %vm44, %v188, 0.0
    %v193 = vsel %vm45, %v190, 0.0
    %v194 = vsel %vm44, %v189, 0.0
    %v195 = vsel %vm45, %v191, 0.0
    %v196 = vmul.f32 %v192, 0.60653067
    %v197 = vmul.f32 %v193, 0.60653067
    %v198 = vmul.f32 %v194, 0.60653067
    %v199 = vmul.f32 %v195, 0.60653067
    %v200 = vadd.f32 %v179, %v196
    %v201 = vadd.f32 %v180, %v197
    %v202 = vadd.f32 %v181, %v198
    %v203 = vadd.f32 %v182, %v199
    %v204 = vrot.slane %v137, 2
    %v205 = vrot.slane %v139, 2
    %v206 = vrot.slane %v138, 2
    %v207 = vrot.slane %v140, 2
    %vm208 = vcmp.lt.s32.totalorder %v28, 6
    %v209 = vsel %vm208, %v204, %v206
    %v210 = vsel %vm208, %v205, %v207
    %v211 = vsel %vm208, %v206, %v204
    %v212 = vsel %vm208, %v207, %v205
    %v213 = vsel %vm46, %v209, 0.0
    %v214 = vsel %vm47, %v211, 0.0
    %v215 = vsel %vm46, %v210, 0.0
    %v216 = vsel %vm47, %v212, 0.0
    %v217 = vmul.f32 %v213, 0.13533528
    %v218 = vmul.f32 %v214, 0.13533528
    %v219 = vmul.f32 %v215, 0.13533528
    %v220 = vmul.f32 %v216, 0.13533528
    %v221 = vadd.f32 %v200, %v217
    %v222 = vadd.f32 %v201, %v218
    %v223 = vadd.f32 %v202, %v219
    %v224 = vadd.f32 %v203, %v220
    %225 = vrot.lane.b32.xlu0 %v221, 1
    %v226 = vpop.permute.xlu0 %225
    %227 = vrot.lane.b32.xlu0 %v222, 1
    %v228 = vpop.permute.xlu0 %227
    %229 = vrot.lane.b32.xlu0 %v223, 1
    %v230 = vpop.permute.xlu0 %229
    %231 = vrot.lane.b32.xlu0 %v224, 1
    %v232 = vpop.permute.xlu0 %231
    %v233 = vsel %vm53, %v226, 0.0
    %v234 = vsel %vm53, %v228, 0.0
    %v235 = vsel %vm53, %v230, 0.0
    %v236 = vsel %vm53, %v232, 0.0
    %237 = vrot.lane.b32.xlu0 %v221, 127
    %v238 = vpop.permute.xlu0 %237
    %239 = vrot.lane.b32.xlu0 %v222, 127
    %v240 = vpop.permute.xlu0 %239
    %241 = vrot.lane.b32.xlu0 %v223, 127
    %v242 = vpop.permute.xlu0 %241
    %243 = vrot.lane.b32.xlu0 %v224, 127
    %v244 = vpop.permute.xlu0 %243
    %v245 = vsel %vm54, %v238, 0.0
    %v246 = vsel %vm54, %v240, 0.0
    %v247 = vsel %vm54, %v242, 0.0
    %v248 = vsel %vm54, %v244, 0.0
    %v249 = vsub.f32 %v233, %v245
    %v250 = vsub.f32 %v234, %v246
    %v251 = vsub.f32 %v235, %v247
    %v252 = vsub.f32 %v236, %v248
    %v253 = vmul.f32 %v249, 2.0
    %v254 = vmul.f32 %v250, 2.0
    %v255 = vmul.f32 %v251, 2.0
    %v256 = vmul.f32 %v252, 2.0
    %v257 = vrot.slane %v249, 7
    %v258 = vrot.slane %v251, 7
    %v259 = vrot.slane %v250, 7
    %v260 = vrot.slane %v252, 7
    %v261 = vsel %vm166, %v257, %v259
    %v262 = vsel %vm166, %v258, %v260
    %v263 = vsel %vm166, %v259, %v257
    %v264 = vsel %vm166, %v260, %v258
    %v265 = vsel %vm42, %v263, 0.0
    %v266 = vsel %vm43, %v261, 0.0
    %v267 = vsel %vm42, %v264, 0.0
    %v268 = vsel %vm43, %v262, 0.0
    %v269 = vadd.f32 %v253, %v265
    %v270 = vadd.f32 %v254, %v266
    %v271 = vadd.f32 %v255, %v267
    %v272 = vadd.f32 %v256, %v268
    %v273 = vrot.slane %v249, 1
    %v274 = vrot.slane %v251, 1
    %v275 = vrot.slane %v250, 1
    %v276 = vrot.slane %v252, 1
    %v277 = vsel %vm187, %v273, %v275
    %v278 = vsel %vm187, %v274, %v276
    %v279 = vsel %vm187, %v275, %v273
    %v280 = vsel %vm187, %v276, %v274
    %v281 = vsel %vm44, %v277, 0.0
    %v282 = vsel %vm45, %v279, 0.0
    %v283 = vsel %vm44, %v278, 0.0
    %v284 = vsel %vm45, %v280, 0.0
    %v285 = vadd.f32 %v269, %v281
    %v286 = vadd.f32 %v270, %v282
    %v287 = vadd.f32 %v271, %v283
    %v288 = vadd.f32 %v272, %v284
    %v289 = vrot.slane %v221, 7
    %v290 = vrot.slane %v223, 7
    %v291 = vrot.slane %v222, 7
    %v292 = vrot.slane %v224, 7
    %v293 = vsel %vm166, %v289, %v291
    %v294 = vsel %vm166, %v290, %v292
    %v295 = vsel %vm166, %v291, %v289
    %v296 = vsel %vm166, %v292, %v290
    %v297 = vsel %vm42, %v295, 0.0
    %v298 = vsel %vm43, %v293, 0.0
    %v299 = vsel %vm42, %v296, 0.0
    %v300 = vsel %vm43, %v294, 0.0
    %v301 = vrot.slane %v221, 1
    %v302 = vrot.slane %v223, 1
    %v303 = vrot.slane %v222, 1
    %v304 = vrot.slane %v224, 1
    %v305 = vsel %vm187, %v301, %v303
    %v306 = vsel %vm187, %v302, %v304
    %v307 = vsel %vm187, %v303, %v301
    %v308 = vsel %vm187, %v304, %v302
    %v309 = vsel %vm44, %v305, 0.0
    %v310 = vsel %vm45, %v307, 0.0
    %v311 = vsel %vm44, %v306, 0.0
    %v312 = vsel %vm45, %v308, 0.0
    %v313 = vsub.f32 %v297, %v309
    %v314 = vsub.f32 %v298, %v310
    %v315 = vsub.f32 %v299, %v311
    %v316 = vsub.f32 %v300, %v312
    %v317 = vmul.f32 %v313, 2.0
    %v318 = vmul.f32 %v314, 2.0
    %v319 = vmul.f32 %v315, 2.0
    %v320 = vmul.f32 %v316, 2.0
    %321 = vrot.lane.b32.xlu0 %v313, 1
    %v322 = vpop.permute.xlu0 %321
    %323 = vrot.lane.b32.xlu0 %v314, 1
    %v324 = vpop.permute.xlu0 %323
    %325 = vrot.lane.b32.xlu0 %v315, 1
    %v326 = vpop.permute.xlu0 %325
    %327 = vrot.lane.b32.xlu0 %v316, 1
    %v328 = vpop.permute.xlu0 %327
    %v329 = vsel %vm53, %v322, 0.0
    %v330 = vsel %vm53, %v324, 0.0
    %v331 = vsel %vm53, %v326, 0.0
    %v332 = vsel %vm53, %v328, 0.0
    %v333 = vadd.f32 %v317, %v329
    %v334 = vadd.f32 %v318, %v330
    %v335 = vadd.f32 %v319, %v331
    %v336 = vadd.f32 %v320, %v332
    %337 = vrot.lane.b32.xlu0 %v313, 127
    %v338 = vpop.permute.xlu0 %337
    %339 = vrot.lane.b32.xlu0 %v314, 127
    %v340 = vpop.permute.xlu0 %339
    %341 = vrot.lane.b32.xlu0 %v315, 127
    %v342 = vpop.permute.xlu0 %341
    %343 = vrot.lane.b32.xlu0 %v316, 127
    %v344 = vpop.permute.xlu0 %343
    %v345 = vsel %vm54, %v338, 0.0
    %v346 = vsel %vm54, %v340, 0.0
    %v347 = vsel %vm54, %v342, 0.0
    %v348 = vsel %vm54, %v344, 0.0
    %v349 = vadd.f32 %v333, %v345
    %v350 = vadd.f32 %v334, %v346
    %v351 = vadd.f32 %v335, %v347
    %v352 = vadd.f32 %v336, %v348
    %v353 = vmul.f32 %v285, %v285
    %v354 = vmul.f32 %v286, %v286
    %v355 = vmul.f32 %v287, %v287
    %v356 = vmul.f32 %v288, %v288
    %v357 = vmul.f32 %v349, %v349
    %v358 = vmul.f32 %v350, %v350
    %v359 = vmul.f32 %v351, %v351
    %v360 = vmul.f32 %v352, %v352
    %v361 = vadd.f32 %v353, %v357
    %v362 = vadd.f32 %v354, %v358
    %v363 = vadd.f32 %v355, %v359
    %v364 = vadd.f32 %v356, %v360
    %v365 = vrsqrt.pop %v361
    %v366 = vmul.f32 %v361, %v365
    %vm367 = vcmp.eq.f32.partialorder %v361, inf
    %v368 = vsel %vm367, %v361, %v366
    %vm369 = vcmp.eq.f32.partialorder %v361, 0.0
    %v370 = vand.u32 %v361, 2147483648
    %v371 = vsel %vm369, %v370, %v368
    %v372 = vrsqrt.pop %v362
    %v373 = vmul.f32 %v362, %v372
    %vm374 = vcmp.eq.f32.partialorder %v362, inf
    %v375 = vsel %vm374, %v362, %v373
    %vm376 = vcmp.eq.f32.partialorder %v362, 0.0
    %v377 = vand.u32 %v362, 2147483648
    %v378 = vsel %vm376, %v377, %v375
    %v379 = vrsqrt.pop %v363
    %v380 = vmul.f32 %v363, %v379
    %vm381 = vcmp.eq.f32.partialorder %v363, inf
    %v382 = vsel %vm381, %v363, %v380
    %vm383 = vcmp.eq.f32.partialorder %v363, 0.0
    %v384 = vand.u32 %v363, 2147483648
    %v385 = vsel %vm383, %v384, %v382
    %v386 = vrsqrt.pop %v364
    %v387 = vmul.f32 %v364, %v386
    %vm388 = vcmp.eq.f32.partialorder %v364, inf
    %v389 = vsel %vm388, %v364, %v387
    %vm390 = vcmp.eq.f32.partialorder %v364, 0.0
    %v391 = vand.u32 %v364, 2147483648
    %v392 = vsel %vm390, %v391, %v389
    %v393 = vsel %vm59, %v371, 0.0
    %v394 = vsel %vm60, %v378, 0.0
    %v395 = vsel %vm59, %v385, 0.0
    %v396 = vsel %vm60, %v392, 0.0
    %v397 = vmax.f32 %v393, %v394
    %v398 = vrot.slane %v397, 4
    %v399 = vmax.f32 %v397, %v398
    %v400 = vrot.slane %v399, 2
    %v401 = vmax.f32 %v399, %v400
    %v402 = vrot.slane %v401, 1
    %v403 = vmax.f32 %v401, %v402
    %v404 = vmax.f32 %v395, %v396
    %v405 = vrot.slane %v404, 4
    %v406 = vmax.f32 %v404, %v405
    %v407 = vrot.slane %v406, 2
    %v408 = vmax.f32 %v406, %v407
    %v409 = vrot.slane %v408, 1
    %v410 = vmax.f32 %v408, %v409
    %411 = vmax.xlane.f32.xlu0 %v403
    %v412 = vpop.xlane.xlu0 %411
    %413 = vmax.xlane.f32.xlu0 %v410
    %v414 = vpop.xlane.xlu0 %413
    %v415 = vrcp.pop %v412
    %v416 = vrcp.pop %v414
    %v417 = vmul.f32 %v415, 255.0
    %v418 = vmul.f32 %v416, 255.0
    %v419 = vmul.f32 %v349, -0.92387867
    %v420 = vmul.f32 %v350, -0.92387867
    %v421 = vmul.f32 %v351, -0.92387867
    %v422 = vmul.f32 %v352, -0.92387867
    %v423 = vmul.f32 %v285, -0.38268557
    %v424 = vmul.f32 %v286, -0.38268557
    %v425 = vmul.f32 %v287, -0.38268557
    %v426 = vmul.f32 %v288, -0.38268557
    %v427 = vsub.f32 %v419, %v423
    %v428 = vsub.f32 %v420, %v424
    %v429 = vsub.f32 %v421, %v425
    %v430 = vsub.f32 %v422, %v426
    %v431 = vmul.f32 %v349, -0.3826819
    %v432 = vmul.f32 %v350, -0.3826819
    %v433 = vmul.f32 %v351, -0.3826819
    %v434 = vmul.f32 %v352, -0.3826819
    %v435 = vmul.f32 %v285, -0.92388016
    %v436 = vmul.f32 %v286, -0.92388016
    %v437 = vmul.f32 %v287, -0.92388016
    %v438 = vmul.f32 %v288, -0.92388016
    %v439 = vsub.f32 %v431, %v435
    %v440 = vsub.f32 %v432, %v436
    %v441 = vsub.f32 %v433, %v437
    %v442 = vsub.f32 %v434, %v438
    %vm443 = vcmp.ge.f32.partialorder %v427, 0.0
    %vm444 = vcmp.ge.f32.partialorder %v428, 0.0
    %vm445 = vcmp.ge.f32.partialorder %v429, 0.0
    %vm446 = vcmp.ge.f32.partialorder %v430, 0.0
    %vm447 = vcmp.lt.f32.partialorder %v439, 0.0
    %vm448 = vcmp.lt.f32.partialorder %v440, 0.0
    %vm449 = vcmp.lt.f32.partialorder %v441, 0.0
    %vm450 = vcmp.lt.f32.partialorder %v442, 0.0
    %vm451 = vmand %vm443, %vm447
    %vm452 = vmand %vm444, %vm448
    %vm453 = vmand %vm445, %vm449
    %vm454 = vmand %vm446, %vm450
    %v455 = vsel %vm451, 1, 0
    %v456 = vsel %vm452, 1, 0
    %v457 = vsel %vm453, 1, 0
    %v458 = vsel %vm454, 1, 0
    %v459 = vmul.f32 %v349, 0.38268435
    %v460 = vmul.f32 %v350, 0.38268435
    %v461 = vmul.f32 %v351, 0.38268435
    %v462 = vmul.f32 %v352, 0.38268435
    %v463 = vmul.f32 %v285, -0.92387915
    %v464 = vmul.f32 %v286, -0.92387915
    %v465 = vmul.f32 %v287, -0.92387915
    %v466 = vmul.f32 %v288, -0.92387915
    %v467 = vsub.f32 %v459, %v463
    %v468 = vsub.f32 %v460, %v464
    %v469 = vsub.f32 %v461, %v465
    %v470 = vsub.f32 %v462, %v466
    %vm471 = vcmp.ge.f32.partialorder %v439, 0.0
    %vm472 = vcmp.ge.f32.partialorder %v440, 0.0
    %vm473 = vcmp.ge.f32.partialorder %v441, 0.0
    %vm474 = vcmp.ge.f32.partialorder %v442, 0.0
    %vm475 = vcmp.lt.f32.partialorder %v467, 0.0
    %vm476 = vcmp.lt.f32.partialorder %v468, 0.0
    %vm477 = vcmp.lt.f32.partialorder %v469, 0.0
    %vm478 = vcmp.lt.f32.partialorder %v470, 0.0
    %vm479 = vmand %vm471, %vm475
    %vm480 = vmand %vm472, %vm476
    %vm481 = vmand %vm473, %vm477
    %vm482 = vmand %vm474, %vm478
    %v483 = vsel %vm479, 2, %v455
    %v484 = vsel %vm480, 2, %v456
    %v485 = vsel %vm481, 2, %v457
    %v486 = vsel %vm482, 2, %v458
    %v487 = vmul.f32 %v349, 0.9238797
    %v488 = vmul.f32 %v350, 0.9238797
    %v489 = vmul.f32 %v351, 0.9238797
    %v490 = vmul.f32 %v352, 0.9238797
    %v491 = vmul.f32 %v285, -0.38268313
    %v492 = vmul.f32 %v286, -0.38268313
    %v493 = vmul.f32 %v287, -0.38268313
    %v494 = vmul.f32 %v288, -0.38268313
    %v495 = vsub.f32 %v487, %v491
    %v496 = vsub.f32 %v488, %v492
    %v497 = vsub.f32 %v489, %v493
    %v498 = vsub.f32 %v490, %v494
    %vm499 = vcmp.ge.f32.partialorder %v467, 0.0
    %vm500 = vcmp.ge.f32.partialorder %v468, 0.0
    %vm501 = vcmp.ge.f32.partialorder %v469, 0.0
    %vm502 = vcmp.ge.f32.partialorder %v470, 0.0
    %vm503 = vcmp.lt.f32.partialorder %v495, 0.0
    %vm504 = vcmp.lt.f32.partialorder %v496, 0.0
    %vm505 = vcmp.lt.f32.partialorder %v497, 0.0
    %vm506 = vcmp.lt.f32.partialorder %v498, 0.0
    %vm507 = vmand %vm499, %vm503
    %vm508 = vmand %vm500, %vm504
    %vm509 = vmand %vm501, %vm505
    %vm510 = vmand %vm502, %vm506
    %v511 = vsel %vm507, 3, %v483
    %v512 = vsel %vm508, 3, %v484
    %v513 = vsel %vm509, 3, %v485
    %v514 = vsel %vm510, 3, %v486
    %v515 = vmul.f32 %v285, 0.38268313
    %v516 = vmul.f32 %v286, 0.38268313
    %v517 = vmul.f32 %v287, 0.38268313
    %v518 = vmul.f32 %v288, 0.38268313
    %v519 = vsub.f32 %v487, %v515
    %v520 = vsub.f32 %v488, %v516
    %v521 = vsub.f32 %v489, %v517
    %v522 = vsub.f32 %v490, %v518
    %vm523 = vcmp.ge.f32.partialorder %v495, 0.0
    %vm524 = vcmp.ge.f32.partialorder %v496, 0.0
    %vm525 = vcmp.ge.f32.partialorder %v497, 0.0
    %vm526 = vcmp.ge.f32.partialorder %v498, 0.0
    %vm527 = vcmp.lt.f32.partialorder %v519, 0.0
    %vm528 = vcmp.lt.f32.partialorder %v520, 0.0
    %vm529 = vcmp.lt.f32.partialorder %v521, 0.0
    %vm530 = vcmp.lt.f32.partialorder %v522, 0.0
    %vm531 = vmand %vm523, %vm527
    %vm532 = vmand %vm524, %vm528
    %vm533 = vmand %vm525, %vm529
    %vm534 = vmand %vm526, %vm530
    %v535 = vsel %vm531, 4, %v511
    %v536 = vsel %vm532, 4, %v512
    %v537 = vsel %vm533, 4, %v513
    %v538 = vsel %vm534, 4, %v514
    %v539 = vmul.f32 %v285, 0.92387915
    %v540 = vmul.f32 %v286, 0.92387915
    %v541 = vmul.f32 %v287, 0.92387915
    %v542 = vmul.f32 %v288, 0.92387915
    %v543 = vsub.f32 %v459, %v539
    %v544 = vsub.f32 %v460, %v540
    %v545 = vsub.f32 %v461, %v541
    %v546 = vsub.f32 %v462, %v542
    %vm547 = vcmp.ge.f32.partialorder %v519, 0.0
    %vm548 = vcmp.ge.f32.partialorder %v520, 0.0
    %vm549 = vcmp.ge.f32.partialorder %v521, 0.0
    %vm550 = vcmp.ge.f32.partialorder %v522, 0.0
    %vm551 = vcmp.lt.f32.partialorder %v543, 0.0
    %vm552 = vcmp.lt.f32.partialorder %v544, 0.0
    %vm553 = vcmp.lt.f32.partialorder %v545, 0.0
    %vm554 = vcmp.lt.f32.partialorder %v546, 0.0
    %vm555 = vmand %vm547, %vm551
    %vm556 = vmand %vm548, %vm552
    %vm557 = vmand %vm549, %vm553
    %vm558 = vmand %vm550, %vm554
    %v559 = vsel %vm555, 5, %v535
    %v560 = vsel %vm556, 5, %v536
    %v561 = vsel %vm557, 5, %v537
    %v562 = vsel %vm558, 5, %v538
    %v563 = vmul.f32 %v285, 0.92388016
    %v564 = vmul.f32 %v286, 0.92388016
    %v565 = vmul.f32 %v287, 0.92388016
    %v566 = vmul.f32 %v288, 0.92388016
    %v567 = vsub.f32 %v431, %v563
    %v568 = vsub.f32 %v432, %v564
    %v569 = vsub.f32 %v433, %v565
    %v570 = vsub.f32 %v434, %v566
    %vm571 = vcmp.ge.f32.partialorder %v543, 0.0
    %vm572 = vcmp.ge.f32.partialorder %v544, 0.0
    %vm573 = vcmp.ge.f32.partialorder %v545, 0.0
    %vm574 = vcmp.ge.f32.partialorder %v546, 0.0
    %vm575 = vcmp.lt.f32.partialorder %v567, 0.0
    %vm576 = vcmp.lt.f32.partialorder %v568, 0.0
    %vm577 = vcmp.lt.f32.partialorder %v569, 0.0
    %vm578 = vcmp.lt.f32.partialorder %v570, 0.0
    %vm579 = vmand %vm571, %vm575
    %vm580 = vmand %vm572, %vm576
    %vm581 = vmand %vm573, %vm577
    %vm582 = vmand %vm574, %vm578
    %v583 = vsel %vm579, 6, %v559
    %v584 = vsel %vm580, 6, %v560
    %v585 = vsel %vm581, 6, %v561
    %v586 = vsel %vm582, 6, %v562
    %v587 = vmul.f32 %v285, 0.38268557
    %v588 = vmul.f32 %v286, 0.38268557
    %v589 = vmul.f32 %v287, 0.38268557
    %v590 = vmul.f32 %v288, 0.38268557
    %v591 = vsub.f32 %v419, %v587
    %v592 = vsub.f32 %v420, %v588
    %v593 = vsub.f32 %v421, %v589
    %v594 = vsub.f32 %v422, %v590
    %vm595 = vcmp.ge.f32.partialorder %v567, 0.0
    %vm596 = vcmp.ge.f32.partialorder %v568, 0.0
    %vm597 = vcmp.ge.f32.partialorder %v569, 0.0
    %vm598 = vcmp.ge.f32.partialorder %v570, 0.0
    %vm599 = vcmp.lt.f32.partialorder %v591, 0.0
    %vm600 = vcmp.lt.f32.partialorder %v592, 0.0
    %vm601 = vcmp.lt.f32.partialorder %v593, 0.0
    %vm602 = vcmp.lt.f32.partialorder %v594, 0.0
    %vm603 = vmand %vm595, %vm599
    %vm604 = vmand %vm596, %vm600
    %vm605 = vmand %vm597, %vm601
    %vm606 = vmand %vm598, %vm602
    %v607 = vsel %vm603, 7, %v583
    %v608 = vsel %vm604, 7, %v584
    %v609 = vsel %vm605, 7, %v585
    %v610 = vsel %vm606, 7, %v586
    %vm611 = vcmp.eq.f32.partialorder %v285, 0.0
    %vm612 = vcmp.eq.f32.partialorder %v286, 0.0
    %vm613 = vcmp.eq.f32.partialorder %v287, 0.0
    %vm614 = vcmp.eq.f32.partialorder %v288, 0.0
    %vm615 = vcmp.eq.f32.partialorder %v349, 0.0
    %vm616 = vcmp.eq.f32.partialorder %v350, 0.0
    %vm617 = vcmp.eq.f32.partialorder %v351, 0.0
    %vm618 = vcmp.eq.f32.partialorder %v352, 0.0
    %vm619 = vmand %vm611, %vm615
    %vm620 = vmand %vm612, %vm616
    %vm621 = vmand %vm613, %vm617
    %vm622 = vmand %vm614, %vm618
    %v623 = vsel %vm619, 4, %v607
    %v624 = vsel %vm620, 4, %v608
    %v625 = vsel %vm621, 4, %v609
    %v626 = vsel %vm622, 4, %v610
    %vm627 = vcmp.ge.s32.totalorder %v623, 4
    %vm628 = vcmp.ge.s32.totalorder %v624, 4
    %vm629 = vcmp.ge.s32.totalorder %v625, 4
    %vm630 = vcmp.ge.s32.totalorder %v626, 4
    %v631 = vsub.s32 %v623, 4
    %v632 = vsub.s32 %v624, 4
    %v633 = vsub.s32 %v625, 4
    %v634 = vsub.s32 %v626, 4
    %v635 = vadd.s32 %v623, 4
    %v636 = vadd.s32 %v624, 4
    %v637 = vadd.s32 %v625, 4
    %v638 = vadd.s32 %v626, 4
    %v639 = vsel %vm627, %v631, %v635
    %v640 = vsel %vm628, %v632, %v636
    %v641 = vsel %vm629, %v633, %v637
    %v642 = vsel %vm630, %v634, %v638
    %v643 = vrot.slane %v371, 7
    %v644 = vrot.slane %v385, 7
    %v645 = vrot.slane %v378, 7
    %v646 = vrot.slane %v392, 7
    %v647 = vsel %vm166, %v643, %v645
    %v648 = vsel %vm166, %v644, %v646
    %v649 = vsel %vm166, %v645, %v643
    %v650 = vsel %vm166, %v646, %v644
    %v651 = vsel %vm42, %v649, 0.0
    %v652 = vsel %vm43, %v647, 0.0
    %v653 = vsel %vm42, %v650, 0.0
    %v654 = vsel %vm43, %v648, 0.0
    %v655 = vrot.slane %v371, 1
    %v656 = vrot.slane %v385, 1
    %v657 = vrot.slane %v378, 1
    %v658 = vrot.slane %v392, 1
    %v659 = vsel %vm187, %v655, %v657
    %v660 = vsel %vm187, %v656, %v658
    %v661 = vsel %vm187, %v657, %v655
    %v662 = vsel %vm187, %v658, %v656
    %v663 = vsel %vm44, %v659, 0.0
    %v664 = vsel %vm45, %v661, 0.0
    %v665 = vsel %vm44, %v660, 0.0
    %v666 = vsel %vm45, %v662, 0.0
    %667 = vrot.lane.b32.xlu0 %v371, 127
    %v668 = vpop.permute.xlu0 %667
    %669 = vrot.lane.b32.xlu0 %v378, 127
    %v670 = vpop.permute.xlu0 %669
    %671 = vrot.lane.b32.xlu0 %v385, 127
    %v672 = vpop.permute.xlu0 %671
    %673 = vrot.lane.b32.xlu0 %v392, 127
    %v674 = vpop.permute.xlu0 %673
    %v675 = vsel %vm54, %v668, 0.0
    %v676 = vsel %vm54, %v670, 0.0
    %v677 = vsel %vm54, %v672, 0.0
    %v678 = vsel %vm54, %v674, 0.0
    %v679 = vsub.f32 %v371, %v675
    %v680 = vsub.f32 %v378, %v676
    %v681 = vsub.f32 %v385, %v677
    %v682 = vsub.f32 %v392, %v678
    %vm683 = vcmp.eq.s32.totalorder %v623, 0
    %vm684 = vcmp.eq.s32.totalorder %v624, 0
    %vm685 = vcmp.eq.s32.totalorder %v625, 0
    %vm686 = vcmp.eq.s32.totalorder %v626, 0
    %v687 = vsel %vm683, %v679, 0.0
    %v688 = vsel %vm684, %v680, 0.0
    %v689 = vsel %vm685, %v681, 0.0
    %v690 = vsel %vm686, %v682, 0.0
    %vm691 = vcmp.eq.s32.totalorder %v639, 0
    %vm692 = vcmp.eq.s32.totalorder %v640, 0
    %vm693 = vcmp.eq.s32.totalorder %v641, 0
    %vm694 = vcmp.eq.s32.totalorder %v642, 0
    %v695 = vsel %vm691, %v679, 0.0
    %v696 = vsel %vm692, %v680, 0.0
    %v697 = vsel %vm693, %v681, 0.0
    %v698 = vsel %vm694, %v682, 0.0
    %699 = vrot.lane.b32.xlu0 %v663, 127
    %v700 = vpop.permute.xlu0 %699
    %701 = vrot.lane.b32.xlu0 %v664, 127
    %v702 = vpop.permute.xlu0 %701
    %703 = vrot.lane.b32.xlu0 %v665, 127
    %v704 = vpop.permute.xlu0 %703
    %705 = vrot.lane.b32.xlu0 %v666, 127
    %v706 = vpop.permute.xlu0 %705
    %v707 = vsel %vm54, %v700, 0.0
    %v708 = vsel %vm54, %v702, 0.0
    %v709 = vsel %vm54, %v704, 0.0
    %v710 = vsel %vm54, %v706, 0.0
    %v711 = vsub.f32 %v371, %v707
    %v712 = vsub.f32 %v378, %v708
    %v713 = vsub.f32 %v385, %v709
    %v714 = vsub.f32 %v392, %v710
    %vm715 = vcmp.eq.s32.totalorder %v623, 1
    %vm716 = vcmp.eq.s32.totalorder %v624, 1
    %vm717 = vcmp.eq.s32.totalorder %v625, 1
    %vm718 = vcmp.eq.s32.totalorder %v626, 1
    %v719 = vsel %vm715, %v711, %v687
    %v720 = vsel %vm716, %v712, %v688
    %v721 = vsel %vm717, %v713, %v689
    %v722 = vsel %vm718, %v714, %v690
    %vm723 = vcmp.eq.s32.totalorder %v639, 1
    %vm724 = vcmp.eq.s32.totalorder %v640, 1
    %vm725 = vcmp.eq.s32.totalorder %v641, 1
    %vm726 = vcmp.eq.s32.totalorder %v642, 1
    %v727 = vsel %vm723, %v711, %v695
    %v728 = vsel %vm724, %v712, %v696
    %v729 = vsel %vm725, %v713, %v697
    %v730 = vsel %vm726, %v714, %v698
    %v731 = vsub.f32 %v371, %v663
    %v732 = vsub.f32 %v378, %v664
    %v733 = vsub.f32 %v385, %v665
    %v734 = vsub.f32 %v392, %v666
    %vm735 = vcmp.eq.s32.totalorder %v623, 2
    %vm736 = vcmp.eq.s32.totalorder %v624, 2
    %vm737 = vcmp.eq.s32.totalorder %v625, 2
    %vm738 = vcmp.eq.s32.totalorder %v626, 2
    %v739 = vsel %vm735, %v731, %v719
    %v740 = vsel %vm736, %v732, %v720
    %v741 = vsel %vm737, %v733, %v721
    %v742 = vsel %vm738, %v734, %v722
    %vm743 = vcmp.eq.s32.totalorder %v639, 2
    %vm744 = vcmp.eq.s32.totalorder %v640, 2
    %vm745 = vcmp.eq.s32.totalorder %v641, 2
    %vm746 = vcmp.eq.s32.totalorder %v642, 2
    %v747 = vsel %vm743, %v731, %v727
    %v748 = vsel %vm744, %v732, %v728
    %v749 = vsel %vm745, %v733, %v729
    %v750 = vsel %vm746, %v734, %v730
    %751 = vrot.lane.b32.xlu0 %v663, 1
    %v752 = vpop.permute.xlu0 %751
    %753 = vrot.lane.b32.xlu0 %v664, 1
    %v754 = vpop.permute.xlu0 %753
    %755 = vrot.lane.b32.xlu0 %v665, 1
    %v756 = vpop.permute.xlu0 %755
    %757 = vrot.lane.b32.xlu0 %v666, 1
    %v758 = vpop.permute.xlu0 %757
    %v759 = vsel %vm53, %v752, 0.0
    %v760 = vsel %vm53, %v754, 0.0
    %v761 = vsel %vm53, %v756, 0.0
    %v762 = vsel %vm53, %v758, 0.0
    %v763 = vsub.f32 %v371, %v759
    %v764 = vsub.f32 %v378, %v760
    %v765 = vsub.f32 %v385, %v761
    %v766 = vsub.f32 %v392, %v762
    %vm767 = vcmp.eq.s32.totalorder %v623, 3
    %vm768 = vcmp.eq.s32.totalorder %v624, 3
    %vm769 = vcmp.eq.s32.totalorder %v625, 3
    %vm770 = vcmp.eq.s32.totalorder %v626, 3
    %v771 = vsel %vm767, %v763, %v739
    %v772 = vsel %vm768, %v764, %v740
    %v773 = vsel %vm769, %v765, %v741
    %v774 = vsel %vm770, %v766, %v742
    %vm775 = vcmp.eq.s32.totalorder %v639, 3
    %vm776 = vcmp.eq.s32.totalorder %v640, 3
    %vm777 = vcmp.eq.s32.totalorder %v641, 3
    %vm778 = vcmp.eq.s32.totalorder %v642, 3
    %v779 = vsel %vm775, %v763, %v747
    %v780 = vsel %vm776, %v764, %v748
    %v781 = vsel %vm777, %v765, %v749
    %v782 = vsel %vm778, %v766, %v750
    %783 = vrot.lane.b32.xlu0 %v371, 1
    %v784 = vpop.permute.xlu0 %783
    %785 = vrot.lane.b32.xlu0 %v378, 1
    %v786 = vpop.permute.xlu0 %785
    %787 = vrot.lane.b32.xlu0 %v385, 1
    %v788 = vpop.permute.xlu0 %787
    %789 = vrot.lane.b32.xlu0 %v392, 1
    %v790 = vpop.permute.xlu0 %789
    %v791 = vsel %vm53, %v784, 0.0
    %v792 = vsel %vm53, %v786, 0.0
    %v793 = vsel %vm53, %v788, 0.0
    %v794 = vsel %vm53, %v790, 0.0
    %v795 = vsub.f32 %v371, %v791
    %v796 = vsub.f32 %v378, %v792
    %v797 = vsub.f32 %v385, %v793
    %v798 = vsub.f32 %v392, %v794
    %vm799 = vcmp.eq.s32.totalorder %v623, 4
    %vm800 = vcmp.eq.s32.totalorder %v624, 4
    %vm801 = vcmp.eq.s32.totalorder %v625, 4
    %vm802 = vcmp.eq.s32.totalorder %v626, 4
    %v803 = vsel %vm799, %v795, %v771
    %v804 = vsel %vm800, %v796, %v772
    %v805 = vsel %vm801, %v797, %v773
    %v806 = vsel %vm802, %v798, %v774
    %vm807 = vcmp.eq.s32.totalorder %v639, 4
    %vm808 = vcmp.eq.s32.totalorder %v640, 4
    %vm809 = vcmp.eq.s32.totalorder %v641, 4
    %vm810 = vcmp.eq.s32.totalorder %v642, 4
    %v811 = vsel %vm807, %v795, %v779
    %v812 = vsel %vm808, %v796, %v780
    %v813 = vsel %vm809, %v797, %v781
    %v814 = vsel %vm810, %v798, %v782
    %815 = vrot.lane.b32.xlu0 %v651, 1
    %v816 = vpop.permute.xlu0 %815
    %817 = vrot.lane.b32.xlu0 %v652, 1
    %v818 = vpop.permute.xlu0 %817
    %819 = vrot.lane.b32.xlu0 %v653, 1
    %v820 = vpop.permute.xlu0 %819
    %821 = vrot.lane.b32.xlu0 %v654, 1
    %v822 = vpop.permute.xlu0 %821
    %v823 = vsel %vm53, %v816, 0.0
    %v824 = vsel %vm53, %v818, 0.0
    %v825 = vsel %vm53, %v820, 0.0
    %v826 = vsel %vm53, %v822, 0.0
    %v827 = vsub.f32 %v371, %v823
    %v828 = vsub.f32 %v378, %v824
    %v829 = vsub.f32 %v385, %v825
    %v830 = vsub.f32 %v392, %v826
    %vm831 = vcmp.eq.s32.totalorder %v623, 5
    %vm832 = vcmp.eq.s32.totalorder %v624, 5
    %vm833 = vcmp.eq.s32.totalorder %v625, 5
    %vm834 = vcmp.eq.s32.totalorder %v626, 5
    %v835 = vsel %vm831, %v827, %v803
    %v836 = vsel %vm832, %v828, %v804
    %v837 = vsel %vm833, %v829, %v805
    %v838 = vsel %vm834, %v830, %v806
    %vm839 = vcmp.eq.s32.totalorder %v639, 5
    %vm840 = vcmp.eq.s32.totalorder %v640, 5
    %vm841 = vcmp.eq.s32.totalorder %v641, 5
    %vm842 = vcmp.eq.s32.totalorder %v642, 5
    %v843 = vsel %vm839, %v827, %v811
    %v844 = vsel %vm840, %v828, %v812
    %v845 = vsel %vm841, %v829, %v813
    %v846 = vsel %vm842, %v830, %v814
    %v847 = vsub.f32 %v371, %v651
    %v848 = vsub.f32 %v378, %v652
    %v849 = vsub.f32 %v385, %v653
    %v850 = vsub.f32 %v392, %v654
    %vm851 = vcmp.eq.s32.totalorder %v623, 6
    %vm852 = vcmp.eq.s32.totalorder %v624, 6
    %vm853 = vcmp.eq.s32.totalorder %v625, 6
    %vm854 = vcmp.eq.s32.totalorder %v626, 6
    %v855 = vsel %vm851, %v847, %v835
    %v856 = vsel %vm852, %v848, %v836
    %v857 = vsel %vm853, %v849, %v837
    %v858 = vsel %vm854, %v850, %v838
    %vm859 = vcmp.eq.s32.totalorder %v639, 6
    %vm860 = vcmp.eq.s32.totalorder %v640, 6
    %vm861 = vcmp.eq.s32.totalorder %v641, 6
    %vm862 = vcmp.eq.s32.totalorder %v642, 6
    %v863 = vsel %vm859, %v847, %v843
    %v864 = vsel %vm860, %v848, %v844
    %v865 = vsel %vm861, %v849, %v845
    %v866 = vsel %vm862, %v850, %v846
    %867 = vrot.lane.b32.xlu0 %v651, 127
    %v868 = vpop.permute.xlu0 %867
    %869 = vrot.lane.b32.xlu0 %v652, 127
    %v870 = vpop.permute.xlu0 %869
    %871 = vrot.lane.b32.xlu0 %v653, 127
    %v872 = vpop.permute.xlu0 %871
    %873 = vrot.lane.b32.xlu0 %v654, 127
    %v874 = vpop.permute.xlu0 %873
    %v875 = vsel %vm54, %v868, 0.0
    %v876 = vsel %vm54, %v870, 0.0
    %v877 = vsel %vm54, %v872, 0.0
    %v878 = vsel %vm54, %v874, 0.0
    %v879 = vsub.f32 %v371, %v875
    %v880 = vsub.f32 %v378, %v876
    %v881 = vsub.f32 %v385, %v877
    %v882 = vsub.f32 %v392, %v878
    %vm883 = vcmp.eq.s32.totalorder %v623, 7
    %vm884 = vcmp.eq.s32.totalorder %v624, 7
    %vm885 = vcmp.eq.s32.totalorder %v625, 7
    %vm886 = vcmp.eq.s32.totalorder %v626, 7
    %v887 = vsel %vm883, %v879, %v855
    %v888 = vsel %vm884, %v880, %v856
    %v889 = vsel %vm885, %v881, %v857
    %v890 = vsel %vm886, %v882, %v858
    %vm891 = vcmp.eq.s32.totalorder %v639, 7
    %vm892 = vcmp.eq.s32.totalorder %v640, 7
    %vm893 = vcmp.eq.s32.totalorder %v641, 7
    %vm894 = vcmp.eq.s32.totalorder %v642, 7
    %v895 = vsel %vm891, %v879, %v863
    %v896 = vsel %vm892, %v880, %v864
    %v897 = vsel %vm893, %v881, %v865
    %v898 = vsel %vm894, %v882, %v866
    %v899 = vmin.f32 %v887, %v895
    %v900 = vmin.f32 %v888, %v896
    %v901 = vmin.f32 %v889, %v897
    %v902 = vmin.f32 %v890, %v898
    %vm903 = vcmp.gt.f32.partialorder %v899, 0.0
    %vm904 = vcmp.gt.f32.partialorder %v900, 0.0
    %vm905 = vcmp.gt.f32.partialorder %v901, 0.0
    %vm906 = vcmp.gt.f32.partialorder %v902, 0.0
    %v907 = vmul.f32 %v371, %v417
    %v908 = vmul.f32 %v378, %v417
    %v909 = vmul.f32 %v385, %v418
    %v910 = vmul.f32 %v392, %v418
    %v911 = vsel %vm903, %v907, 0.0
    %v912 = vsel %vm904, %v908, 0.0
    %v913 = vsel %vm905, %v909, 0.0
    %v914 = vsel %vm906, %v910, 0.0
    %915 = vst [vmem:[#allocation5] sm:$0xff] %v911
    %916 = vst [vmem:[#allocation5 + $0x8] sm:$0xff] %v912
    %917 = vst [vmem:[#allocation5 + $0x10] sm:$0xff] %v913
    %918 = vst [vmem:[#allocation5 + $0x18] sm:$0xff] %v914
    // Predicated region
    $region10: #{tpu_custom_call.1} parent=1 // pred_check
      _
    $region11: #{tpu_custom_call.1} parent=1 // pred_check_branch
      %920 = sbr.rel (0) target = $region13
    $region12: #{tpu_custom_call.1} parent=1 // pred_region
      %s922 = ssub.s32 512, 512
      %923 = vsyncadd [#allocation4], %s922
      %s924 = sshll.u32 [#allocation5], 4
      %s925 = int_to_ptr.vmem [resolvable:$true] %s924
      %930 = dma.vmem_to_hbm [thread:$0]  %s925, 512, %s1, [#allocation4], 128, 128, 8
    $region13: #{tpu_custom_call.1} parent=1 // pred_fallthru
      _
    // Predicated region
    $region14: #{tpu_custom_call.1} parent=1 // pred_check
      _
    $region15: #{tpu_custom_call.1} parent=1 // pred_check_branch
      %932 = sbr.rel (0) target = $region17
    $region16: #{tpu_custom_call.1} parent=1 // pred_region
      %933 = dma.done [#allocation4], 512
    $region17: #{tpu_custom_call.1} parent=1 // pred_fallthru
      _
    %934 = vsyncpa [#allocation3], 1
    %935 = vsyncpa [#allocation4], 1

</llo_original>
